<compile_context>
chip_gen: v7x
topology: tpu7x:2x2x1
jax: 0.10.0
libtpu: 0.0.40
codegen_flags: <defaults>
</compile_context>

<pallas_src>
import functools

import jax
import jax.numpy as jnp
from jax.experimental import pallas as pl
from jax.experimental.pallas import tpu as pltpu


def _round_up(x, m):
    return (x + m - 1) // m * m


def _pad_to(a, shape):
    return jnp.pad(a, [(0, t - s) for s, t in zip(a.shape, shape)])


# ----------------------------------------------------------------------------
# Fused forward kernel
# ----------------------------------------------------------------------------
def gin_meanpool_kernel(num_layers, num_classes,
                        eps_ref,                      # SMEM (L,) f32
                        a_ref, x_ref, scale_ref, pool_ref,
                        w1_ref, b1_ref, w2_ref, b2_ref,
                        bn_scale_ref, bn_shift_ref,
                        wl1_ref, bl1_ref, wl2_ref, bl2_ref,
                        o_ref):
    a = a_ref[...]                                    # [N, N] bf16 adjacency: A[dst, src] = multiplicity
    h = x_ref[...]                                    # [N, D] f32 padded node features
    scale = scale_ref[...]                            # [N, D] f32 1/|graph|, pre-broadcast, 0 on padded rows

    # All GIN layers, fully VMEM-resident (static unroll, weights are tiny).
    # bf16 only at the MXU inputs; f32 accumulation; f32 VPU epilogues.
    for l in range(num_layers):
        agg = jnp.dot(a, h.astype(jnp.bfloat16), preferred_element_type=jnp.float32)
        pre = (1.0 + eps_ref[l]) * h + agg
        h1 = jnp.maximum(
            jnp.dot(pre.astype(jnp.bfloat16), w1_ref[l],
                    preferred_element_type=jnp.float32) + b1_ref[l], 0.0)
        h2 = jnp.maximum(
            jnp.dot(h1.astype(jnp.bfloat16), w2_ref[l],
                    preferred_element_type=jnp.float32) + b2_ref[l], 0.0)
        # Folded eval-mode BatchNorm, then per-node inverse-graph-size scaling.
        # scale == 0 on padded node rows keeps them exactly zero every layer.
        h = (h2 * bn_scale_ref[l] + bn_shift_ref[l]) * scale

    # global_mean_pool -> relu(lin1) -> (dropout = identity in eval) -> lin2 -> log_softmax
    pooled = jnp.dot(pool_ref[...], h.astype(jnp.bfloat16),
                     preferred_element_type=jnp.float32)                        # [G, D]
    z1 = jnp.maximum(
        jnp.dot(pooled.astype(jnp.bfloat16), wl1_ref[...],
                preferred_element_type=jnp.float32) + bl1_ref[...], 0.0)
    # TODO(synk): training-mode dropout / BN batch statistics not implemented (eval forward).
    logits = jnp.dot(z1.astype(jnp.bfloat16), wl2_ref[...],
                     preferred_element_type=jnp.float32) + bl2_ref[...]
    # Padded class lanes must not contribute to the softmax.
    col = jax.lax.broadcasted_iota(jnp.int32, logits.shape, 1)
    logits = jnp.where(col < num_classes, logits, -1e30)
    m = jnp.max(logits, axis=-1, keepdims=True)
    z = logits - m
    lse = jnp.log(jnp.sum(jnp.exp(z), axis=-1, keepdims=True))
    o_ref[...] = z - lse


_VMEM = pl.BlockSpec(memory_space=pltpu.MemorySpace.VMEM)
_SMEM = pl.BlockSpec(memory_space=pltpu.MemorySpace.SMEM)


# ----------------------------------------------------------------------------
# Parameter init (PyTorch-like layouts) and one-time kernel-layout packing
# ----------------------------------------------------------------------------
def init_linear(key, out_f, in_f):
    kw, kb = jax.random.split(key)
    bound = 1.0 / jnp.sqrt(in_f)
    w = jax.random.uniform(kw, (out_f, in_f), jnp.float32, -bound, bound)
    b = jax.random.uniform(kb, (out_f,), jnp.float32, -bound, bound)
    return w, b


def init_gin_params(key, num_features, num_classes, num_layers, hidden):
    params = {"convs": []}
    keys = jax.random.split(key, num_layers + 2)
    in_f = num_features
    for l in range(num_layers):
        k1, k2, k3 = jax.random.split(keys[l], 3)
        w1, b1 = init_linear(k1, hidden, in_f)
        w2, b2 = init_linear(k2, hidden, hidden)
        kg, kb2, km, kv, ke = jax.random.split(k3, 5)
        params["convs"].append(dict(
            w1=w1, b1=b1, w2=w2, b2=b2,
            gamma=jax.random.uniform(kg, (hidden,), jnp.float32, 0.5, 1.5),
            beta=0.1 * jax.random.normal(kb2, (hidden,), jnp.float32),
            rm=0.1 * jax.random.normal(km, (hidden,), jnp.float32),
            rv=jax.random.uniform(kv, (hidden,), jnp.float32, 0.5, 1.5),
            eps=jax.random.uniform(ke, (), jnp.float32, -0.1, 0.1),
        ))
        in_f = hidden
    params["lin1"] = init_linear(keys[-2], hidden, hidden)
    params["lin2"] = init_linear(keys[-1], num_classes, hidden)
    return params


def pack_params(params, num_features, hidden, num_classes):
    """One-time preprocessing: transpose weights to [in,out], fold BN, pad lanes
    to 128, cast MXU operands to bf16 (biases / BN stay f32 for the VPU)."""
    d = _round_up(max(num_features, hidden), 128)
    c_pad = _round_up(num_classes, 128)
    bn_eps = 1e-5

    w1s, b1s, w2s, b2s, bss, bhs, epss = [], [], [], [], [], [], []
    for conv in params["convs"]:
        w1s.append(_pad_to(conv["w1"].T, (d, d)).astype(jnp.bfloat16))
        b1s.append(_pad_to(conv["b1"][None, :], (1, d)))
        w2s.append(_pad_to(conv["w2"].T, (d, d)).astype(jnp.bfloat16))
        b2s.append(_pad_to(conv["b2"][None, :], (1, d)))
        bn_scale = conv["gamma"] / jnp.sqrt(conv["rv"] + bn_eps)
        bn_shift = conv["beta"] - conv["rm"] * bn_scale
        bss.append(_pad_to(bn_scale[None, :], (1, d)))
        bhs.append(_pad_to(bn_shift[None, :], (1, d)))
        epss.append(conv["eps"])

    wl1, bl1 = params["lin1"]
    wl2, bl2 = params["lin2"]
    return dict(
        num_layers=len(params["convs"]), num_classes=num_classes, d=d, c_pad=c_pad,
        eps=jnp.stack(epss).astype(jnp.float32),
        w1=jnp.stack(w1s), b1=jnp.stack(b1s),
        w2=jnp.stack(w2s), b2=jnp.stack(b2s),
        bn_scale=jnp.stack(bss), bn_shift=jnp.stack(bhs),
        wl1=_pad_to(wl1.T, (d, d)).astype(jnp.bfloat16),
        bl1=_pad_to(bl1[None, :], (1, d)),
        wl2=_pad_to(wl2.T, (d, c_pad)).astype(jnp.bfloat16),
        bl2=_pad_to(bl2[None, :], (1, c_pad)),
    )


# ----------------------------------------------------------------------------
# Forward wrapper (dense A / scale / pool construction + single pallas_call)
# ----------------------------------------------------------------------------
def gin_meanpool_forward(packed, x, edge_index, batch, num_graphs):
    n = x.shape[0]
    d, c_pad = packed["d"], packed["c_pad"]
    num_layers, num_classes = packed["num_layers"], packed["num_classes"]
    # Node dim padded to 128 so the last dims of A / pool are lane-dense.
    n_pad = _round_up(n, 128)
    g_pad = _round_up(num_graphs, 8)

    src, dst = edge_index[0], edge_index[1]
    # Scatter-add aggregation densified: agg_i = sum_{(j->i)} h_j  ==  (A @ h).
    # bf16 A is exact for edge multiplicities < 256; accumulation stays f32.
    a = (jnp.zeros((n_pad, n_pad), jnp.float32).at[dst, src].add(1.0)
         ).astype(jnp.bfloat16)
    counts = jnp.zeros((num_graphs,), jnp.float32).at[batch].add(1.0)
    # Guard against empty graphs (counts==0 would give inf -> NaN logits).
    inv_size = jnp.where(counts > 0, 1.0 / jnp.maximum(counts, 1.0), 0.0)
    # Pre-broadcast 1/|graph| to [n_pad, d] (f32), zero on padded node rows.
    scale = jnp.zeros((n_pad, d), jnp.float32).at[:n, :].set(inv_size[batch][:, None])
    pool = _pad_to((batch[None, :] == jnp.arange(num_graphs)[:, None]).astype(jnp.float32)
                   * inv_size[:, None], (g_pad, n_pad)).astype(jnp.bfloat16)
    x_pad = _pad_to(x.astype(jnp.float32), (n_pad, d))

    flops = (num_layers * (2 * n_pad * n_pad * d + 4 * n_pad * d * d)
             + 2 * g_pad * n_pad * d + 2 * g_pad * d * d + 2 * g_pad * d * c_pad)
    operands = (packed["eps"], a, x_pad, scale, pool,
                packed["w1"], packed["b1"], packed["w2"], packed["b2"],
                packed["bn_scale"], packed["bn_shift"],
                packed["wl1"], packed["bl1"], packed["wl2"], packed["bl2"])
    operand_bytes = sum(int(op.size) * op.dtype.itemsize for op in operands)
    out_bytes = g_pad * c_pad * 4
    act_bytes = 6 * n_pad * d * 4        # agg/pre/h1/h2/h f32 working set
    # Size the scoped-VMEM limit to the real footprint (default is only
    # 16 MiB on v5e / 32 MiB on v6e-v7x); clamp to v7x's 64 MiB physical VMEM.
    vmem_limit = int(min(64 << 20,
                         max(32 << 20, 2 * (operand_bytes + out_bytes + act_bytes))))

    out = pl.pallas_call(
        functools.partial(gin_meanpool_kernel, num_layers, num_classes),
        out_shape=jax.ShapeDtypeStruct((g_pad, c_pad), jnp.float32),
        in_specs=[_SMEM] + [_VMEM] * 14,
        out_specs=_VMEM,
        compiler_params=pltpu.CompilerParams(vmem_limit_bytes=vmem_limit),
        cost_estimate=pl.CostEstimate(flops=flops,
                                      transcendentals=g_pad * (c_pad + 1),
                                      bytes_accessed=operand_bytes + out_bytes),
    )(*operands)
    return out[:num_graphs, :num_classes]


# ----------------------------------------------------------------------------
# Pure-JAX reference of the same forward (module semantics).
# mxu_dtype=f32  -> faithful f32 module reference.
# mxu_dtype=bf16 -> mirrors the kernel's bf16-at-MXU / f32-accumulate scheme.
# ----------------------------------------------------------------------------
def gin_meanpool_reference(params, x, edge_index, batch, num_graphs,
                           mxu_dtype=jnp.float32):
    def mm(lhs, rhs):
        return jnp.dot(lhs.astype(mxu_dtype), rhs.astype(mxu_dtype),
                       preferred_element_type=jnp.float32)

    n = x.shape[0]
    src, dst = edge_index[0], edge_index[1]
    a = jnp.zeros((n, n), jnp.float32).at[dst, src].add(1.0)
    counts = jnp.zeros((num_graphs,), jnp.float32).at[batch].add(1.0)
    inv_size = 1.0 / counts
    s = inv_size[batch][:, None]
    h = x.astype(jnp.float32)
    for conv in params["convs"]:
        pre = (1.0 + conv["eps"]) * h + mm(a, h)
        h1 = jnp.maximum(mm(pre, conv["w1"].T) + conv["b1"], 0.0)
        h2 = jnp.maximum(mm(h1, conv["w2"].T) + conv["b2"], 0.0)
        hbn = (h2 - conv["rm"]) / jnp.sqrt(conv["rv"] + 1e-5) * conv["gamma"] + conv["beta"]
        h = hbn * s
    pool = (batch[None, :] == jnp.arange(num_graphs)[:, None]).astype(jnp.float32) * inv_size[:, None]
    pooled = mm(pool, h)
    z1 = jnp.maximum(mm(pooled, params["lin1"][0].T) + params["lin1"][1], 0.0)
    logits = mm(z1, params["lin2"][0].T) + params["lin2"][1]
    return jax.nn.log_softmax(logits, axis=-1)


if __name__ == "__main__":
    key = jax.random.PRNGKey(0)

    num_nodes = 16
    num_features = 8
    hidden = 32
    num_classes = 4
    num_layers = 3            # conv1 + 2 extra GINConv layers
    num_graphs = 2
    num_edges = 40

    k_x, k_e, k_p = jax.random.split(key, 3)
    x = jax.random.normal(k_x, (num_nodes, num_features), jnp.float32)
    edge_index = jax.random.randint(k_e, (2, num_edges), 0, num_nodes, jnp.int32)
    # nodes 0..7 -> graph 0, nodes 8..15 -> graph 1
    batch = jnp.concatenate([jnp.zeros(8, jnp.int32), jnp.ones(8, jnp.int32)])

    params = init_gin_params(k_p, num_features, num_classes, num_layers, hidden)
    packed = pack_params(params, num_features, hidden, num_classes)   # one-time layout prep

    out = gin_meanpool_forward(packed, x, edge_index, batch, num_graphs)
    out = jax.block_until_ready(out)
    assert out.shape == (num_graphs, num_classes)

    # Tight check vs a pure-JAX mirror of the kernel's mixed precision scheme.
    ref_mixed = gin_meanpool_reference(params, x, edge_index, batch, num_graphs,
                                       mxu_dtype=jnp.bfloat16)
    assert jnp.allclose(out, ref_mixed, atol=5e-3, rtol=5e-3), "mismatch vs bf16-mirror reference"

    # Sanity check vs the f32 module reference (looser: bf16 MXU operands).
    ref_f32 = gin_meanpool_reference(params, x, edge_index, batch, num_graphs,
                                     mxu_dtype=jnp.float32)
    assert jnp.allclose(out, ref_f32, atol=1e-1, rtol=1e-1), "mismatch vs f32 module reference"
    assert jnp.array_equal(jnp.argmax(out, -1), jnp.argmax(ref_f32, -1)), "argmax mismatch"

    print("KERNEL_OK")
</pallas_src>

<mosaic_0001>
module attributes {stable_mosaic.version = 11 : i64} {
  func.func @gin_meanpool_kernel(%arg0: memref<3xf32, #tpu.memory_space<smem>>, %arg1: memref<128x128xbf16, #tpu.memory_space<vmem>>, %arg2: memref<128x128xf32, #tpu.memory_space<vmem>>, %arg3: memref<128x128xf32, #tpu.memory_space<vmem>>, %arg4: memref<8x128xbf16, #tpu.memory_space<vmem>>, %arg5: memref<3x128x128xbf16, #tpu.memory_space<vmem>>, %arg6: memref<3x1x128xf32, #tpu.memory_space<vmem>>, %arg7: memref<3x128x128xbf16, #tpu.memory_space<vmem>>, %arg8: memref<3x1x128xf32, #tpu.memory_space<vmem>>, %arg9: memref<3x1x128xf32, #tpu.memory_space<vmem>>, %arg10: memref<3x1x128xf32, #tpu.memory_space<vmem>>, %arg11: memref<128x128xbf16, #tpu.memory_space<vmem>>, %arg12: memref<1x128xf32, #tpu.memory_space<vmem>>, %arg13: memref<128x128xbf16, #tpu.memory_space<vmem>>, %arg14: memref<1x128xf32, #tpu.memory_space<vmem>>, %arg15: memref<8x128xf32, #tpu.memory_space<vmem>>) attributes {dimension_semantics = [], scalar_prefetch = 0 : i64, scratch_operands = 0 : i64, tpu.core_type = #tpu.core_type<tc>} {
    %c0 = arith.constant 0 : index
    %c0_0 = arith.constant 0 : index
    %0 = vector.load %arg1[%c0, %c0_0] : memref<128x128xbf16, #tpu.memory_space<vmem>>, vector<128x128xbf16>
    %c0_1 = arith.constant 0 : index
    %c0_2 = arith.constant 0 : index
    %1 = vector.load %arg2[%c0_1, %c0_2] : memref<128x128xf32, #tpu.memory_space<vmem>>, vector<128x128xf32>
    %c0_3 = arith.constant 0 : index
    %c0_4 = arith.constant 0 : index
    %2 = vector.load %arg3[%c0_3, %c0_4] : memref<128x128xf32, #tpu.memory_space<vmem>>, vector<128x128xf32>
    %3 = arith.truncf %1 : vector<128x128xf32> to vector<128x128xbf16>
    %cst = arith.constant dense<0.000000e+00> : vector<128x128xf32>
    %4 = tpu.matmul %0, %3, %cst {dimension_numbers = #tpu.dot_dimension_numbers<[1], [0], [0], [1], [0, 0, 1, 1], [], []>} : vector<128x128xbf16>, vector<128x128xbf16>, vector<128x128xf32> -> vector<128x128xf32>
    %c0_5 = arith.constant 0 : index
    %5 = memref.load %arg0[%c0_5] : memref<3xf32, #tpu.memory_space<smem>>
    %cst_6 = arith.constant 1.000000e+00 : f32
    %6 = arith.addf %cst_6, %5 : f32
    %7 = vector.broadcast %6 : f32 to vector<128x128xf32>
    %8 = arith.mulf %7, %1 : vector<128x128xf32>
    %9 = arith.addf %8, %4 : vector<128x128xf32>
    %10 = arith.truncf %9 : vector<128x128xf32> to vector<128x128xbf16>
    %c0_7 = arith.constant 0 : index
    %c0_8 = arith.constant 0 : index
    %c0_9 = arith.constant 0 : index
    %11 = vector.load %arg5[%c0_7, %c0_8, %c0_9] : memref<3x128x128xbf16, #tpu.memory_space<vmem>>, vector<1x128x128xbf16>
    %12 = vector.shape_cast %11 : vector<1x128x128xbf16> to vector<128x128xbf16>
    %cst_10 = arith.constant dense<0.000000e+00> : vector<128x128xf32>
    %13 = tpu.matmul %10, %12, %cst_10 {dimension_numbers = #tpu.dot_dimension_numbers<[1], [0], [0], [1], [0, 0, 1, 1], [], []>} : vector<128x128xbf16>, vector<128x128xbf16>, vector<128x128xf32> -> vector<128x128xf32>
    %c0_11 = arith.constant 0 : index
    %c0_12 = arith.constant 0 : index
    %c0_13 = arith.constant 0 : index
    %14 = vector.load %arg6[%c0_11, %c0_12, %c0_13] : memref<3x1x128xf32, #tpu.memory_space<vmem>>, vector<1x1x128xf32>
    %15 = vector.shape_cast %14 : vector<1x1x128xf32> to vector<1x128xf32>
    %16 = vector.broadcast %15 : vector<1x128xf32> to vector<128x128xf32>
    %17 = arith.addf %13, %16 : vector<128x128xf32>
    %cst_14 = arith.constant 0.000000e+00 : f32
    %18 = vector.broadcast %cst_14 : f32 to vector<128x128xf32>
    %19 = arith.maximumf %17, %18 : vector<128x128xf32>
    %20 = arith.truncf %19 : vector<128x128xf32> to vector<128x128xbf16>
    %c0_15 = arith.constant 0 : index
    %c0_16 = arith.constant 0 : index
    %c0_17 = arith.constant 0 : index
    %21 = vector.load %arg7[%c0_15, %c0_16, %c0_17] : memref<3x128x128xbf16, #tpu.memory_space<vmem>>, vector<1x128x128xbf16>
    %22 = vector.shape_cast %21 : vector<1x128x128xbf16> to vector<128x128xbf16>
    %cst_18 = arith.constant dense<0.000000e+00> : vector<128x128xf32>
    %23 = tpu.matmul %20, %22, %cst_18 {dimension_numbers = #tpu.dot_dimension_numbers<[1], [0], [0], [1], [0, 0, 1, 1], [], []>} : vector<128x128xbf16>, vector<128x128xbf16>, vector<128x128xf32> -> vector<128x128xf32>
    %c0_19 = arith.constant 0 : index
    %c0_20 = arith.constant 0 : index
    %c0_21 = arith.constant 0 : index
    %24 = vector.load %arg8[%c0_19, %c0_20, %c0_21] : memref<3x1x128xf32, #tpu.memory_space<vmem>>, vector<1x1x128xf32>
    %25 = vector.shape_cast %24 : vector<1x1x128xf32> to vector<1x128xf32>
    %26 = vector.broadcast %25 : vector<1x128xf32> to vector<128x128xf32>
    %27 = arith.addf %23, %26 : vector<128x128xf32>
    %cst_22 = arith.constant 0.000000e+00 : f32
    %28 = vector.broadcast %cst_22 : f32 to vector<128x128xf32>
    %29 = arith.maximumf %27, %28 : vector<128x128xf32>
    %c0_23 = arith.constant 0 : index
    %c0_24 = arith.constant 0 : index
    %c0_25 = arith.constant 0 : index
    %30 = vector.load %arg9[%c0_23, %c0_24, %c0_25] : memref<3x1x128xf32, #tpu.memory_space<vmem>>, vector<1x1x128xf32>
    %31 = vector.shape_cast %30 : vector<1x1x128xf32> to vector<1x128xf32>
    %32 = vector.broadcast %31 : vector<1x128xf32> to vector<128x128xf32>
    %33 = arith.mulf %29, %32 : vector<128x128xf32>
    %c0_26 = arith.constant 0 : index
    %c0_27 = arith.constant 0 : index
    %c0_28 = arith.constant 0 : index
    %34 = vector.load %arg10[%c0_26, %c0_27, %c0_28] : memref<3x1x128xf32, #tpu.memory_space<vmem>>, vector<1x1x128xf32>
    %35 = vector.shape_cast %34 : vector<1x1x128xf32> to vector<1x128xf32>
    %36 = vector.broadcast %35 : vector<1x128xf32> to vector<128x128xf32>
    %37 = arith.addf %33, %36 : vector<128x128xf32>
    %38 = arith.mulf %37, %2 : vector<128x128xf32>
    %39 = arith.truncf %38 : vector<128x128xf32> to vector<128x128xbf16>
    %cst_29 = arith.constant dense<0.000000e+00> : vector<128x128xf32>
    %40 = tpu.matmul %0, %39, %cst_29 {dimension_numbers = #tpu.dot_dimension_numbers<[1], [0], [0], [1], [0, 0, 1, 1], [], []>} : vector<128x128xbf16>, vector<128x128xbf16>, vector<128x128xf32> -> vector<128x128xf32>
    %c1 = arith.constant 1 : index
    %41 = memref.load %arg0[%c1] : memref<3xf32, #tpu.memory_space<smem>>
    %cst_30 = arith.constant 1.000000e+00 : f32
    %42 = arith.addf %cst_30, %41 : f32
    %43 = vector.broadcast %42 : f32 to vector<128x128xf32>
    %44 = arith.mulf %43, %38 : vector<128x128xf32>
    %45 = arith.addf %44, %40 : vector<128x128xf32>
    %46 = arith.truncf %45 : vector<128x128xf32> to vector<128x128xbf16>
    %c1_31 = arith.constant 1 : index
    %c0_32 = arith.constant 0 : index
    %c0_33 = arith.constant 0 : index
    %47 = vector.load %arg5[%c1_31, %c0_32, %c0_33] : memref<3x128x128xbf16, #tpu.memory_space<vmem>>, vector<1x128x128xbf16>
    %48 = vector.shape_cast %47 : vector<1x128x128xbf16> to vector<128x128xbf16>
    %cst_34 = arith.constant dense<0.000000e+00> : vector<128x128xf32>
    %49 = tpu.matmul %46, %48, %cst_34 {dimension_numbers = #tpu.dot_dimension_numbers<[1], [0], [0], [1], [0, 0, 1, 1], [], []>} : vector<128x128xbf16>, vector<128x128xbf16>, vector<128x128xf32> -> vector<128x128xf32>
    %c1_35 = arith.constant 1 : index
    %c0_36 = arith.constant 0 : index
    %c0_37 = arith.constant 0 : index
    %50 = vector.load %arg6[%c1_35, %c0_36, %c0_37] : memref<3x1x128xf32, #tpu.memory_space<vmem>>, vector<1x1x128xf32>
    %51 = vector.shape_cast %50 : vector<1x1x128xf32> to vector<1x128xf32>
    %52 = vector.broadcast %51 : vector<1x128xf32> to vector<128x128xf32>
    %53 = arith.addf %49, %52 : vector<128x128xf32>
    %cst_38 = arith.constant 0.000000e+00 : f32
    %54 = vector.broadcast %cst_38 : f32 to vector<128x128xf32>
    %55 = arith.maximumf %53, %54 : vector<128x128xf32>
    %56 = arith.truncf %55 : vector<128x128xf32> to vector<128x128xbf16>
    %c1_39 = arith.constant 1 : index
    %c0_40 = arith.constant 0 : index
    %c0_41 = arith.constant 0 : index
    %57 = vector.load %arg7[%c1_39, %c0_40, %c0_41] : memref<3x128x128xbf16, #tpu.memory_space<vmem>>, vector<1x128x128xbf16>
    %58 = vector.shape_cast %57 : vector<1x128x128xbf16> to vector<128x128xbf16>
    %cst_42 = arith.constant dense<0.000000e+00> : vector<128x128xf32>
    %59 = tpu.matmul %56, %58, %cst_42 {dimension_numbers = #tpu.dot_dimension_numbers<[1], [0], [0], [1], [0, 0, 1, 1], [], []>} : vector<128x128xbf16>, vector<128x128xbf16>, vector<128x128xf32> -> vector<128x128xf32>
    %c1_43 = arith.constant 1 : index
    %c0_44 = arith.constant 0 : index
    %c0_45 = arith.constant 0 : index
    %60 = vector.load %arg8[%c1_43, %c0_44, %c0_45] : memref<3x1x128xf32, #tpu.memory_space<vmem>>, vector<1x1x128xf32>
    %61 = vector.shape_cast %60 : vector<1x1x128xf32> to vector<1x128xf32>
    %62 = vector.broadcast %61 : vector<1x128xf32> to vector<128x128xf32>
    %63 = arith.addf %59, %62 : vector<128x128xf32>
    %cst_46 = arith.constant 0.000000e+00 : f32
    %64 = vector.broadcast %cst_46 : f32 to vector<128x128xf32>
    %65 = arith.maximumf %63, %64 : vector<128x128xf32>
    %c1_47 = arith.constant 1 : index
    %c0_48 = arith.constant 0 : index
    %c0_49 = arith.constant 0 : index
    %66 = vector.load %arg9[%c1_47, %c0_48, %c0_49] : memref<3x1x128xf32, #tpu.memory_space<vmem>>, vector<1x1x128xf32>
    %67 = vector.shape_cast %66 : vector<1x1x128xf32> to vector<1x128xf32>
    %68 = vector.broadcast %67 : vector<1x128xf32> to vector<128x128xf32>
    %69 = arith.mulf %65, %68 : vector<128x128xf32>
    %c1_50 = arith.constant 1 : index
    %c0_51 = arith.constant 0 : index
    %c0_52 = arith.constant 0 : index
    %70 = vector.load %arg10[%c1_50, %c0_51, %c0_52] : memref<3x1x128xf32, #tpu.memory_space<vmem>>, vector<1x1x128xf32>
    %71 = vector.shape_cast %70 : vector<1x1x128xf32> to vector<1x128xf32>
    %72 = vector.broadcast %71 : vector<1x128xf32> to vector<128x128xf32>
    %73 = arith.addf %69, %72 : vector<128x128xf32>
    %74 = arith.mulf %73, %2 : vector<128x128xf32>
    %75 = arith.truncf %74 : vector<128x128xf32> to vector<128x128xbf16>
    %cst_53 = arith.constant dense<0.000000e+00> : vector<128x128xf32>
    %76 = tpu.matmul %0, %75, %cst_53 {dimension_numbers = #tpu.dot_dimension_numbers<[1], [0], [0], [1], [0, 0, 1, 1], [], []>} : vector<128x128xbf16>, vector<128x128xbf16>, vector<128x128xf32> -> vector<128x128xf32>
    %c2 = arith.constant 2 : index
    %77 = memref.load %arg0[%c2] : memref<3xf32, #tpu.memory_space<smem>>
    %cst_54 = arith.constant 1.000000e+00 : f32
    %78 = arith.addf %cst_54, %77 : f32
    %79 = vector.broadcast %78 : f32 to vector<128x128xf32>
    %80 = arith.mulf %79, %74 : vector<128x128xf32>
    %81 = arith.addf %80, %76 : vector<128x128xf32>
    %82 = arith.truncf %81 : vector<128x128xf32> to vector<128x128xbf16>
    %c2_55 = arith.constant 2 : index
    %c0_56 = arith.constant 0 : index
    %c0_57 = arith.constant 0 : index
    %83 = vector.load %arg5[%c2_55, %c0_56, %c0_57] : memref<3x128x128xbf16, #tpu.memory_space<vmem>>, vector<1x128x128xbf16>
    %84 = vector.shape_cast %83 : vector<1x128x128xbf16> to vector<128x128xbf16>
    %cst_58 = arith.constant dense<0.000000e+00> : vector<128x128xf32>
    %85 = tpu.matmul %82, %84, %cst_58 {dimension_numbers = #tpu.dot_dimension_numbers<[1], [0], [0], [1], [0, 0, 1, 1], [], []>} : vector<128x128xbf16>, vector<128x128xbf16>, vector<128x128xf32> -> vector<128x128xf32>
    %c2_59 = arith.constant 2 : index
    %c0_60 = arith.constant 0 : index
    %c0_61 = arith.constant 0 : index
    %86 = vector.load %arg6[%c2_59, %c0_60, %c0_61] : memref<3x1x128xf32, #tpu.memory_space<vmem>>, vector<1x1x128xf32>
    %87 = vector.shape_cast %86 : vector<1x1x128xf32> to vector<1x128xf32>
    %88 = vector.broadcast %87 : vector<1x128xf32> to vector<128x128xf32>
    %89 = arith.addf %85, %88 : vector<128x128xf32>
    %cst_62 = arith.constant 0.000000e+00 : f32
    %90 = vector.broadcast %cst_62 : f32 to vector<128x128xf32>
    %91 = arith.maximumf %89, %90 : vector<128x128xf32>
    %92 = arith.truncf %91 : vector<128x128xf32> to vector<128x128xbf16>
    %c2_63 = arith.constant 2 : index
    %c0_64 = arith.constant 0 : index
    %c0_65 = arith.constant 0 : index
    %93 = vector.load %arg7[%c2_63, %c0_64, %c0_65] : memref<3x128x128xbf16, #tpu.memory_space<vmem>>, vector<1x128x128xbf16>
    %94 = vector.shape_cast %93 : vector<1x128x128xbf16> to vector<128x128xbf16>
    %cst_66 = arith.constant dense<0.000000e+00> : vector<128x128xf32>
    %95 = tpu.matmul %92, %94, %cst_66 {dimension_numbers = #tpu.dot_dimension_numbers<[1], [0], [0], [1], [0, 0, 1, 1], [], []>} : vector<128x128xbf16>, vector<128x128xbf16>, vector<128x128xf32> -> vector<128x128xf32>
    %c2_67 = arith.constant 2 : index
    %c0_68 = arith.constant 0 : index
    %c0_69 = arith.constant 0 : index
    %96 = vector.load %arg8[%c2_67, %c0_68, %c0_69] : memref<3x1x128xf32, #tpu.memory_space<vmem>>, vector<1x1x128xf32>
    %97 = vector.shape_cast %96 : vector<1x1x128xf32> to vector<1x128xf32>
    %98 = vector.broadcast %97 : vector<1x128xf32> to vector<128x128xf32>
    %99 = arith.addf %95, %98 : vector<128x128xf32>
    %cst_70 = arith.constant 0.000000e+00 : f32
    %100 = vector.broadcast %cst_70 : f32 to vector<128x128xf32>
    %101 = arith.maximumf %99, %100 : vector<128x128xf32>
    %c2_71 = arith.constant 2 : index
    %c0_72 = arith.constant 0 : index
    %c0_73 = arith.constant 0 : index
    %102 = vector.load %arg9[%c2_71, %c0_72, %c0_73] : memref<3x1x128xf32, #tpu.memory_space<vmem>>, vector<1x1x128xf32>
    %103 = vector.shape_cast %102 : vector<1x1x128xf32> to vector<1x128xf32>
    %104 = vector.broadcast %103 : vector<1x128xf32> to vector<128x128xf32>
    %105 = arith.mulf %101, %104 : vector<128x128xf32>
    %c2_74 = arith.constant 2 : index
    %c0_75 = arith.constant 0 : index
    %c0_76 = arith.constant 0 : index
    %106 = vector.load %arg10[%c2_74, %c0_75, %c0_76] : memref<3x1x128xf32, #tpu.memory_space<vmem>>, vector<1x1x128xf32>
    %107 = vector.shape_cast %106 : vector<1x1x128xf32> to vector<1x128xf32>
    %108 = vector.broadcast %107 : vector<1x128xf32> to vector<128x128xf32>
    %109 = arith.addf %105, %108 : vector<128x128xf32>
    %110 = arith.mulf %109, %2 : vector<128x128xf32>
    %c0_77 = arith.constant 0 : index
    %c0_78 = arith.constant 0 : index
    %111 = vector.load %arg4[%c0_77, %c0_78] : memref<8x128xbf16, #tpu.memory_space<vmem>>, vector<8x128xbf16>
    %112 = arith.truncf %110 : vector<128x128xf32> to vector<128x128xbf16>
    %cst_79 = arith.constant dense<0.000000e+00> : vector<8x128xf32>
    %113 = tpu.matmul %111, %112, %cst_79 {dimension_numbers = #tpu.dot_dimension_numbers<[1], [0], [0], [1], [0, 0, 1, 1], [], []>} : vector<8x128xbf16>, vector<128x128xbf16>, vector<8x128xf32> -> vector<8x128xf32>
    %114 = arith.truncf %113 : vector<8x128xf32> to vector<8x128xbf16>
    %c0_80 = arith.constant 0 : index
    %c0_81 = arith.constant 0 : index
    %115 = vector.load %arg11[%c0_80, %c0_81] : memref<128x128xbf16, #tpu.memory_space<vmem>>, vector<128x128xbf16>
    %cst_82 = arith.constant dense<0.000000e+00> : vector<8x128xf32>
    %116 = tpu.matmul %114, %115, %cst_82 {dimension_numbers = #tpu.dot_dimension_numbers<[1], [0], [0], [1], [0, 0, 1, 1], [], []>} : vector<8x128xbf16>, vector<128x128xbf16>, vector<8x128xf32> -> vector<8x128xf32>
    %c0_83 = arith.constant 0 : index
    %c0_84 = arith.constant 0 : index
    %117 = vector.load %arg12[%c0_83, %c0_84] : memref<1x128xf32, #tpu.memory_space<vmem>>, vector<1x128xf32>
    %118 = vector.broadcast %117 : vector<1x128xf32> to vector<8x128xf32>
    %119 = arith.addf %116, %118 : vector<8x128xf32>
    %cst_85 = arith.constant 0.000000e+00 : f32
    %120 = vector.broadcast %cst_85 : f32 to vector<8x128xf32>
    %121 = arith.maximumf %119, %120 : vector<8x128xf32>
    %122 = arith.truncf %121 : vector<8x128xf32> to vector<8x128xbf16>
    %c0_86 = arith.constant 0 : index
    %c0_87 = arith.constant 0 : index
    %123 = vector.load %arg13[%c0_86, %c0_87] : memref<128x128xbf16, #tpu.memory_space<vmem>>, vector<128x128xbf16>
    %cst_88 = arith.constant dense<0.000000e+00> : vector<8x128xf32>
    %124 = tpu.matmul %122, %123, %cst_88 {dimension_numbers = #tpu.dot_dimension_numbers<[1], [0], [0], [1], [0, 0, 1, 1], [], []>} : vector<8x128xbf16>, vector<128x128xbf16>, vector<8x128xf32> -> vector<8x128xf32>
    %c0_89 = arith.constant 0 : index
    %c0_90 = arith.constant 0 : index
    %125 = vector.load %arg14[%c0_89, %c0_90] : memref<1x128xf32, #tpu.memory_space<vmem>>, vector<1x128xf32>
    %126 = vector.broadcast %125 : vector<1x128xf32> to vector<8x128xf32>
    %127 = arith.addf %124, %126 : vector<8x128xf32>
    %128 = tpu.iota {dimensions = array<i32: 1>} : vector<8x128xi32>
    %c4_i32 = arith.constant 4 : i32
    %129 = vector.broadcast %c4_i32 : i32 to vector<8x128xi32>
    %130 = arith.cmpi slt, %128, %129 : vector<8x128xi32>
    %cst_91 = arith.constant -1.000000e+30 : f32
    %131 = vector.broadcast %cst_91 : f32 to vector<8x128xf32>
    %132 = arith.select %130, %127, %131 : vector<8x128xi1>, vector<8x128xf32>
    %cst_92 = arith.constant dense<0xFF800000> : vector<8xf32>
    %133 = vector.multi_reduction <maximumf>, %132, %cst_92 [1] : vector<8x128xf32> to vector<8xf32>
    %134 = vector.shape_cast %133 : vector<8xf32> to vector<8x1xf32>
    %135 = vector.broadcast %134 : vector<8x1xf32> to vector<8x128xf32>
    %136 = arith.subf %132, %135 : vector<8x128xf32>
    %137 = math.exp %136 : vector<8x128xf32>
    %cst_93 = arith.constant dense<0.000000e+00> : vector<8xf32>
    %138 = vector.multi_reduction <add>, %137, %cst_93 [1] : vector<8x128xf32> to vector<8xf32>
    %139 = vector.shape_cast %138 : vector<8xf32> to vector<8x1xf32>
    %140 = math.log %139 : vector<8x1xf32>
    %141 = vector.broadcast %140 : vector<8x1xf32> to vector<8x128xf32>
    %142 = arith.subf %136, %141 : vector<8x128xf32>
    %c0_94 = arith.constant 0 : index
    %c0_95 = arith.constant 0 : index
    %143 = vector.load %arg15[%c0_94, %c0_95] : memref<8x128xf32, #tpu.memory_space<vmem>>, vector<8x128xf32>
    tpu.vector_store %arg15[%c0_94, %c0_95], %142 {strides = array<i32>} : memref<8x128xf32, #tpu.memory_space<vmem>>, vector<8x128xf32>,
    return
  }
}

</mosaic_0001>

<llo_original>
// kernel: tpu_custom_call.1
$region0: #{tpu_custom_call.1}
  #allocation0 [shape = 'u32[]', space=smem, size = 0x4, offset = 0x4, fixed_abs, tag = 'smem constant byte address 0x4 - core index']
  #allocation1 [shape = 'u32[144,128]{1,0:T(1,128)}', space=vmem, size = 0x12000, scoped, tag = 'internal scratch']
  %s0 = inlined_call_operand.hbm [shape: f32[3], index: 0, kind: input, shape index: {}]
  %s1 = inlined_call_operand.hbm [shape: bf16[128,128], index: 1, kind: input, shape index: {}]
  %s2 = inlined_call_operand.hbm [shape: f32[128,128], index: 2, kind: input, shape index: {}]
  %s3 = inlined_call_operand.hbm [shape: f32[128,128], index: 3, kind: input, shape index: {}]
  %s4 = inlined_call_operand.vmem [shape: bf16[8,128], index: 4, kind: input, shape index: {}]
  %s5 = inlined_call_operand.hbm [shape: bf16[3,128,128], index: 5, kind: input, shape index: {}]
  %s6 = inlined_call_operand.vmem [shape: f32[3,1,128], index: 6, kind: input, shape index: {}]
  %s7 = inlined_call_operand.hbm [shape: bf16[3,128,128], index: 7, kind: input, shape index: {}]
  %s8 = inlined_call_operand.vmem [shape: f32[3,1,128], index: 8, kind: input, shape index: {}]
  %s9 = inlined_call_operand.vmem [shape: f32[3,1,128], index: 9, kind: input, shape index: {}]
  %s10 = inlined_call_operand.vmem [shape: f32[3,1,128], index: 10, kind: input, shape index: {}]
  %s11 = inlined_call_operand.hbm [shape: bf16[128,128], index: 11, kind: input, shape index: {}]
  %s12 = inlined_call_operand.vmem [shape: f32[1,128], index: 12, kind: input, shape index: {}]
  %s13 = inlined_call_operand.hbm [shape: bf16[128,128], index: 13, kind: input, shape index: {}]
  %s14 = inlined_call_operand.vmem [shape: f32[1,128], index: 14, kind: input, shape index: {}]
  %s15 = inlined_call_operand.hbm [shape: f32[8,128], index: 15, kind: output, shape index: {}]
  %s16 = sld [smem:[#allocation0]]
  $region102: #{tpu_custom_call.1} parent=0
    _
  %s18 = ssub.s32 1, %s16
  %s19 = scalar_select 0, %s18, %s16
  $region1: #{tpu_custom_call.1} parent=0
    #allocation2 [shape = 'u8[512]{0}', space=smem, size = 0x200, scoped, tag = 'input window, operand 0, single buffered']
    #allocation3 [shape = 's32[1]{0}', space=sflag, size = 0x4, scoped, tag = 'scoped memory for tpu_custom_call.1']
    #allocation4 [shape = 's32[1]{0}', space=sflag, size = 0x4, scoped, tag = 'scoped memory for tpu_custom_call.1']
    #allocation5 [shape = 's32[1]{0}', space=sflag, size = 0x4, scoped, tag = 'scoped memory for tpu_custom_call.1']
    #allocation6 [shape = 'u8[32768]{0}', space=vmem, size = 0x8000, scoped, tag = 'input window, operand 1, single buffered']
    #allocation7 [shape = 'u8[65536]{0}', space=vmem, size = 0x10000, scoped, tag = 'input window, operand 2, single buffered']
    #allocation8 [shape = 's32[1]{0}', space=sflag, size = 0x4, scoped, tag = 'scoped memory for tpu_custom_call.1']
    #allocation9 [shape = 'u8[65536]{0}', space=vmem, size = 0x10000, scoped, tag = 'input window, operand 3, single buffered']
    #allocation10 [shape = 'u8[98304]{0}', space=vmem, size = 0x18000, scoped, tag = 'input window, operand 5, single buffered']
    #allocation11 [shape = 's32[1]{0}', space=sflag, size = 0x4, scoped, tag = 'scoped memory for tpu_custom_call.1']
    #allocation12 [shape = 'u8[98304]{0}', space=vmem, size = 0x18000, scoped, tag = 'input window, operand 7, single buffered']
    #allocation13 [shape = 'u8[32768]{0}', space=vmem, size = 0x8000, scoped, tag = 'input window, operand 11, single buffered']
    #allocation14 [shape = 's32[1]{0}', space=sflag, size = 0x4, scoped, tag = 'scoped memory for tpu_custom_call.1']
    #allocation15 [shape = 'u8[32768]{0}', space=vmem, size = 0x8000, scoped, tag = 'input window, operand 13, single buffered']
    #allocation16 [shape = 'u8[4096]{0}', space=vmem, size = 0x1000, scoped, tag = 'output window, operand 0, single buffered']
    %20 = vsyncpa [#allocation5], 0
    %21 = vsyncpa [#allocation3], 0
    %22 = vsyncpa [#allocation8], 0
    %23 = vsyncpa [#allocation11], 0
    %24 = vsyncpa [#allocation14], 0
    %25 = vsyncpa [#allocation4], 0
    // Predicated region
    $region2: #{tpu_custom_call.1} parent=1 // pred_check
      _
    $region3: #{tpu_custom_call.1} parent=1 // pred_check_branch
      %27 = sbr.rel (0) target = $region5
    $region4: #{tpu_custom_call.1} parent=1 // pred_region
      %s29 = ssub.s32 16, 16
      %30 = vsyncadd [#allocation5], %s29
      %33 = dma.hbm_to_smem %s0, 16, [#allocation2], [#allocation5]
    $region5: #{tpu_custom_call.1} parent=1 // pred_fallthru
      _
    // Predicated region
    $region6: #{tpu_custom_call.1} parent=1 // pred_check
      _
    $region7: #{tpu_custom_call.1} parent=1 // pred_check_branch
      %35 = sbr.rel (0) target = $region9
    $region8: #{tpu_custom_call.1} parent=1 // pred_region
      %s37 = ssub.s32 1024, 1024
      %38 = vsyncadd [#allocation3], %s37
      %s39 = sshll.u32 [#allocation6], 4
      %s40 = int_to_ptr.vmem [resolvable:$true] %s39
      %45 = dma.hbm_to_vmem [thread:$0]  %s1, 1024, %s40, [#allocation3], 64, 64, 4
    $region9: #{tpu_custom_call.1} parent=1 // pred_fallthru
      _
    // Predicated region
    $region10: #{tpu_custom_call.1} parent=1 // pred_check
      _
    $region11: #{tpu_custom_call.1} parent=1 // pred_check_branch
      %47 = sbr.rel (0) target = $region13
    $region12: #{tpu_custom_call.1} parent=1 // pred_region
      %s49 = ssub.s32 2048, 2048
      %50 = vsyncadd [#allocation8], %s49
      %s51 = sshll.u32 [#allocation7], 4
      %s52 = int_to_ptr.vmem [resolvable:$true] %s51
      %57 = dma.hbm_to_vmem [thread:$0]  %s2, 2048, %s52, [#allocation8], 128, 128, 8
    $region13: #{tpu_custom_call.1} parent=1 // pred_fallthru
      _
    // Predicated region
    $region14: #{tpu_custom_call.1} parent=1 // pred_check
      _
    $region15: #{tpu_custom_call.1} parent=1 // pred_check_branch
      %59 = sbr.rel (0) target = $region17
    $region16: #{tpu_custom_call.1} parent=1 // pred_region
      %s61 = ssub.s32 2048, 2048
      %62 = vsyncadd [#allocation8], %s61
      %s63 = sshll.u32 [#allocation9], 4
      %s64 = int_to_ptr.vmem [resolvable:$true] %s63
      %69 = dma.hbm_to_vmem [thread:$0]  %s3, 2048, %s64, [#allocation8], 128, 128, 8
    $region17: #{tpu_custom_call.1} parent=1 // pred_fallthru
      _
    // Predicated region
    $region18: #{tpu_custom_call.1} parent=1 // pred_check
      _
    $region19: #{tpu_custom_call.1} parent=1 // pred_check_branch
      %71 = sbr.rel (0) target = $region21
    $region20: #{tpu_custom_call.1} parent=1 // pred_region
      _
    $region21: #{tpu_custom_call.1} parent=1 // pred_fallthru
      _
    // Predicated region
    $region22: #{tpu_custom_call.1} parent=1 // pred_check
      _
    $region23: #{tpu_custom_call.1} parent=1 // pred_check_branch
      %73 = sbr.rel (0) target = $region25
    $region24: #{tpu_custom_call.1} parent=1 // pred_region
      %s75 = ssub.s32 3072, 3072
      %76 = vsyncadd [#allocation11], %s75
      %s77 = sshll.u32 [#allocation10], 4
      %s78 = int_to_ptr.vmem [resolvable:$true] %s77
      %83 = dma.hbm_to_vmem [thread:$0]  %s5, 3072, %s78, [#allocation11], 64, 64, 4
    $region25: #{tpu_custom_call.1} parent=1 // pred_fallthru
      _
    // Predicated region
    $region26: #{tpu_custom_call.1} parent=1 // pred_check
      _
    $region27: #{tpu_custom_call.1} parent=1 // pred_check_branch
      %85 = sbr.rel (0) target = $region29
    $region28: #{tpu_custom_call.1} parent=1 // pred_region
      _
    $region29: #{tpu_custom_call.1} parent=1 // pred_fallthru
      _
    // Predicated region
    $region30: #{tpu_custom_call.1} parent=1 // pred_check
      _
    $region31: #{tpu_custom_call.1} parent=1 // pred_check_branch
      %87 = sbr.rel (0) target = $region33
    $region32: #{tpu_custom_call.1} parent=1 // pred_region
      %s89 = ssub.s32 3072, 3072
      %90 = vsyncadd [#allocation11], %s89
      %s91 = sshll.u32 [#allocation12], 4
      %s92 = int_to_ptr.vmem [resolvable:$true] %s91
      %97 = dma.hbm_to_vmem [thread:$0]  %s7, 3072, %s92, [#allocation11], 64, 64, 4
    $region33: #{tpu_custom_call.1} parent=1 // pred_fallthru
      _
    // Predicated region
    $region34: #{tpu_custom_call.1} parent=1 // pred_check
      _
    $region35: #{tpu_custom_call.1} parent=1 // pred_check_branch
      %99 = sbr.rel (0) target = $region37
    $region36: #{tpu_custom_call.1} parent=1 // pred_region
      _
    $region37: #{tpu_custom_call.1} parent=1 // pred_fallthru
      _
    // Predicated region
    $region38: #{tpu_custom_call.1} parent=1 // pred_check
      _
    $region39: #{tpu_custom_call.1} parent=1 // pred_check_branch
      %101 = sbr.rel (0) target = $region41
    $region40: #{tpu_custom_call.1} parent=1 // pred_region
      _
    $region41: #{tpu_custom_call.1} parent=1 // pred_fallthru
      _
    // Predicated region
    $region42: #{tpu_custom_call.1} parent=1 // pred_check
      _
    $region43: #{tpu_custom_call.1} parent=1 // pred_check_branch
      %103 = sbr.rel (0) target = $region45
    $region44: #{tpu_custom_call.1} parent=1 // pred_region
      _
    $region45: #{tpu_custom_call.1} parent=1 // pred_fallthru
      _
    // Predicated region
    $region46: #{tpu_custom_call.1} parent=1 // pred_check
      _
    $region47: #{tpu_custom_call.1} parent=1 // pred_check_branch
      %105 = sbr.rel (0) target = $region49
    $region48: #{tpu_custom_call.1} parent=1 // pred_region
      %s107 = ssub.s32 1024, 1024
      %108 = vsyncadd [#allocation14], %s107
      %s109 = sshll.u32 [#allocation13], 4
      %s110 = int_to_ptr.vmem [resolvable:$true] %s109
      %115 = dma.hbm_to_vmem [thread:$0]  %s11, 1024, %s110, [#allocation14], 64, 64, 4
    $region49: #{tpu_custom_call.1} parent=1 // pred_fallthru
      _
    // Predicated region
    $region50: #{tpu_custom_call.1} parent=1 // pred_check
      _
    $region51: #{tpu_custom_call.1} parent=1 // pred_check_branch
      %117 = sbr.rel (0) target = $region53
    $region52: #{tpu_custom_call.1} parent=1 // pred_region
      _
    $region53: #{tpu_custom_call.1} parent=1 // pred_fallthru
      _
    // Predicated region
    $region54: #{tpu_custom_call.1} parent=1 // pred_check
      _
    $region55: #{tpu_custom_call.1} parent=1 // pred_check_branch
      %119 = sbr.rel (0) target = $region57
    $region56: #{tpu_custom_call.1} parent=1 // pred_region
      %s121 = ssub.s32 1024, 1024
      %122 = vsyncadd [#allocation14], %s121
      %s123 = sshll.u32 [#allocation15], 4
      %s124 = int_to_ptr.vmem [resolvable:$true] %s123
      %129 = dma.hbm_to_vmem [thread:$0]  %s13, 1024, %s124, [#allocation14], 64, 64, 4
    $region57: #{tpu_custom_call.1} parent=1 // pred_fallthru
      _
    // Predicated region
    $region58: #{tpu_custom_call.1} parent=1 // pred_check
      _
    $region59: #{tpu_custom_call.1} parent=1 // pred_check_branch
      %131 = sbr.rel (0) target = $region61
    $region60: #{tpu_custom_call.1} parent=1 // pred_region
      _
    $region61: #{tpu_custom_call.1} parent=1 // pred_fallthru
      _
    // Predicated region
    $region62: #{tpu_custom_call.1} parent=1 // pred_check
      _
    $region63: #{tpu_custom_call.1} parent=1 // pred_check_branch
      %133 = sbr.rel (0) target = $region65
    $region64: #{tpu_custom_call.1} parent=1 // pred_region
      %134 = dma.done [#allocation5], 16
    $region65: #{tpu_custom_call.1} parent=1 // pred_fallthru
      _
    // Predicated region
    $region66: #{tpu_custom_call.1} parent=1 // pred_check
      _
    $region67: #{tpu_custom_call.1} parent=1 // pred_check_branch
      %136 = sbr.rel (0) target = $region69
    $region68: #{tpu_custom_call.1} parent=1 // pred_region
      %137 = dma.done [#allocation3], 1024
    $region69: #{tpu_custom_call.1} parent=1 // pred_fallthru
      _
    // Predicated region
    $region70: #{tpu_custom_call.1} parent=1 // pred_check
      _
    $region71: #{tpu_custom_call.1} parent=1 // pred_check_branch
      %139 = sbr.rel (0) target = $region73
    $region72: #{tpu_custom_call.1} parent=1 // pred_region
      %140 = dma.done [#allocation8], 2048
    $region73: #{tpu_custom_call.1} parent=1 // pred_fallthru
      _
    // Predicated region
    $region74: #{tpu_custom_call.1} parent=1 // pred_check
      _
    $region75: #{tpu_custom_call.1} parent=1 // pred_check_branch
      %142 = sbr.rel (0) target = $region77
    $region76: #{tpu_custom_call.1} parent=1 // pred_region
      %143 = dma.done [#allocation8], 2048
    $region77: #{tpu_custom_call.1} parent=1 // pred_fallthru
      _
    // Predicated region
    $region78: #{tpu_custom_call.1} parent=1 // pred_check
      _
    $region79: #{tpu_custom_call.1} parent=1 // pred_check_branch
      %145 = sbr.rel (0) target = $region81
    $region80: #{tpu_custom_call.1} parent=1 // pred_region
      %146 = dma.done [#allocation11], 3072
    $region81: #{tpu_custom_call.1} parent=1 // pred_fallthru
      _
    // Predicated region
    $region82: #{tpu_custom_call.1} parent=1 // pred_check
      _
    $region83: #{tpu_custom_call.1} parent=1 // pred_check_branch
      %148 = sbr.rel (0) target = $region85
    $region84: #{tpu_custom_call.1} parent=1 // pred_region
      %149 = dma.done [#allocation11], 3072
    $region85: #{tpu_custom_call.1} parent=1 // pred_fallthru
      _
    // Predicated region
    $region86: #{tpu_custom_call.1} parent=1 // pred_check
      _
    $region87: #{tpu_custom_call.1} parent=1 // pred_check_branch
      %151 = sbr.rel (0) target = $region89
    $region88: #{tpu_custom_call.1} parent=1 // pred_region
      %152 = dma.done [#allocation14], 1024
    $region89: #{tpu_custom_call.1} parent=1 // pred_fallthru
      _
    // Predicated region
    $region90: #{tpu_custom_call.1} parent=1 // pred_check
      _
    $region91: #{tpu_custom_call.1} parent=1 // pred_check_branch
      %154 = sbr.rel (0) target = $region93
    $region92: #{tpu_custom_call.1} parent=1 // pred_region
      %155 = dma.done [#allocation14], 1024
    $region93: #{tpu_custom_call.1} parent=1 // pred_fallthru
      _
    %156 = sfence
    %v158 = vld [vmem:[#allocation6] sm:$0xf]
    %v159 = vld [vmem:[#allocation6 + $0x4] sm:$0xf]
    %v160 = vld [vmem:[#allocation6 + $0x8] sm:$0xf]
    %v161 = vld [vmem:[#allocation6 + $0xc] sm:$0xf]
    %v162 = vld [vmem:[#allocation6 + $0x10] sm:$0xf]
    %v163 = vld [vmem:[#allocation6 + $0x14] sm:$0xf]
    %v164 = vld [vmem:[#allocation6 + $0x18] sm:$0xf]
    %v165 = vld [vmem:[#allocation6 + $0x1c] sm:$0xf]
    %v166 = vld [vmem:[#allocation6 + $0x20] sm:$0xf]
    %v167 = vld [vmem:[#allocation6 + $0x24] sm:$0xf]
    %v168 = vld [vmem:[#allocation6 + $0x28] sm:$0xf]
    %v169 = vld [vmem:[#allocation6 + $0x2c] sm:$0xf]
    %v170 = vld [vmem:[#allocation6 + $0x30] sm:$0xf]
    %v171 = vld [vmem:[#allocation6 + $0x34] sm:$0xf]
    %v172 = vld [vmem:[#allocation6 + $0x38] sm:$0xf]
    %v173 = vld [vmem:[#allocation6 + $0x3c] sm:$0xf]
    %v174 = vld [vmem:[#allocation7] sm:$0xff]
    %v175 = vld [vmem:[#allocation7 + $0x8] sm:$0xff]
    %v176 = vld [vmem:[#allocation7 + $0x10] sm:$0xff]
    %v177 = vld [vmem:[#allocation7 + $0x18] sm:$0xff]
    %v178 = vld [vmem:[#allocation7 + $0x20] sm:$0xff]
    %v179 = vld [vmem:[#allocation7 + $0x28] sm:$0xff]
    %v180 = vld [vmem:[#allocation7 + $0x30] sm:$0xff]
    %v181 = vld [vmem:[#allocation7 + $0x38] sm:$0xff]
    %v182 = vld [vmem:[#allocation7 + $0x40] sm:$0xff]
    %v183 = vld [vmem:[#allocation7 + $0x48] sm:$0xff]
    %v184 = vld [vmem:[#allocation7 + $0x50] sm:$0xff]
    %v185 = vld [vmem:[#allocation7 + $0x58] sm:$0xff]
    %v186 = vld [vmem:[#allocation7 + $0x60] sm:$0xff]
    %v187 = vld [vmem:[#allocation7 + $0x68] sm:$0xff]
    %v188 = vld [vmem:[#allocation7 + $0x70] sm:$0xff]
    %v189 = vld [vmem:[#allocation7 + $0x78] sm:$0xff]
    %v190 = vld [vmem:[#allocation9] sm:$0xff]
    %v191 = vld [vmem:[#allocation9 + $0x8] sm:$0xff]
    %v192 = vld [vmem:[#allocation9 + $0x10] sm:$0xff]
    %v193 = vld [vmem:[#allocation9 + $0x18] sm:$0xff]
    %v194 = vld [vmem:[#allocation9 + $0x20] sm:$0xff]
    %v195 = vld [vmem:[#allocation9 + $0x28] sm:$0xff]
    %v196 = vld [vmem:[#allocation9 + $0x30] sm:$0xff]
    %v197 = vld [vmem:[#allocation9 + $0x38] sm:$0xff]
    %v198 = vld [vmem:[#allocation9 + $0x40] sm:$0xff]
    %v199 = vld [vmem:[#allocation9 + $0x48] sm:$0xff]
    %v200 = vld [vmem:[#allocation9 + $0x50] sm:$0xff]
    %v201 = vld [vmem:[#allocation9 + $0x58] sm:$0xff]
    %v202 = vld [vmem:[#allocation9 + $0x60] sm:$0xff]
    %v203 = vld [vmem:[#allocation9 + $0x68] sm:$0xff]
    %v204 = vld [vmem:[#allocation9 + $0x70] sm:$0xff]
    %v205 = vld [vmem:[#allocation9 + $0x78] sm:$0xff]
    %v206 = vpack.c.bf16 %v175, %v174
    %v207 = vpack.c.bf16 %v177, %v176
    %v208 = vpack.c.bf16 %v179, %v178
    %v209 = vpack.c.bf16 %v181, %v180
    %v210 = vpack.c.bf16 %v183, %v182
    %v211 = vpack.c.bf16 %v185, %v184
    %v212 = vpack.c.bf16 %v187, %v186
    %v213 = vpack.c.bf16 %v189, %v188
    %v230 = vunpack.c.l.b16 %v158
    %v231 = vunpack.c.l.b16 %v159
    %v232 = vunpack.c.l.b16 %v160
    %v233 = vunpack.c.l.b16 %v161
    %v234 = vunpack.c.l.b16 %v162
    %v235 = vunpack.c.l.b16 %v163
    %v236 = vunpack.c.l.b16 %v164
    %v237 = vunpack.c.l.b16 %v165
    %v238 = vunpack.c.l.b16 %v166
    %v239 = vunpack.c.l.b16 %v167
    %v240 = vunpack.c.l.b16 %v168
    %v241 = vunpack.c.l.b16 %v169
    %v242 = vunpack.c.l.b16 %v170
    %v243 = vunpack.c.l.b16 %v171
    %v244 = vunpack.c.l.b16 %v172
    %v245 = vunpack.c.l.b16 %v173
    %v246 = vpack.c.b16 %v231, %v230
    %v247 = vpack.c.b16 %v233, %v232
    %v248 = vpack.c.b16 %v235, %v234
    %v249 = vpack.c.b16 %v237, %v236
    %v250 = vpack.c.b16 %v239, %v238
    %v251 = vpack.c.b16 %v241, %v240
    %v252 = vpack.c.b16 %v243, %v242
    %v253 = vpack.c.b16 %v245, %v244
    %262 = vmatprep.subr.bf16.mxu0 0
    %263 = vmatpush1.bf16.msra.mxu0 %v206
    %264 = vmatprep.subr.bf16.mxu0 0
    %265 = vmatpush1.bf16.msra.mxu0 %v207
    %266 = vmatprep.subr.bf16.mxu0 0
    %267 = vmatpush1.bf16.msra.mxu0 %v208
    %268 = vmatprep.subr.bf16.mxu0 0
    %269 = vmatpush1.bf16.msra.mxu0 %v209
    %270 = vmatprep.subr.bf16.mxu0 0
    %271 = vmatpush1.bf16.msra.mxu0 %v210
    %272 = vmatprep.subr.bf16.mxu0 0
    %273 = vmatpush1.bf16.msra.mxu0 %v211
    %274 = vmatprep.subr.bf16.mxu0 0
    %275 = vmatpush1.bf16.msra.mxu0 %v212
    %276 = vmatprep.subr.bf16.mxu0 0
    %277 = vmatpush1.bf16.msra.mxu0 %v213
    %278 = vmatprep.subr.bf16.mxu0 0
    %279 = vmatpush1.bf16.msra.mxu0 0
    %280 = vmatprep.subr.bf16.mxu0 0
    %281 = vmatpush1.bf16.msra.mxu0 0
    %282 = vmatprep.subr.bf16.mxu0 0
    %283 = vmatpush1.bf16.msra.mxu0 0
    %284 = vmatprep.subr.bf16.mxu0 0
    %285 = vmatpush1.bf16.msra.mxu0 0
    %286 = vmatprep.subr.bf16.mxu0 0
    %287 = vmatpush1.bf16.msra.mxu0 0
    %288 = vmatprep.subr.bf16.mxu0 0
    %289 = vmatpush1.bf16.msra.mxu0 0
    %290 = vmatprep.subr.bf16.mxu0 0
    %291 = vmatpush1.bf16.msra.mxu0 0
    %292 = vmatprep.subr.bf16.mxu0 0
    %293 = vmatpush1.bf16.msra.mxu0 0
    %294 = vmatprep.mubr.bf16.mxu0 0
    %295 = vmatmul.mubr.bf16.gmra.mrb[0].mxu0 %v246
    %v296 = vpop.f32.mrb[0].mxu0
    %v297 = vadd.f32 0.0, %v296
    %v298 = vpop.f32.mrb[0].mxu0
    %v299 = vpop.f32.mrb[0].mxu0
    %v300 = vadd.f32 0.0, %v299
    %v301 = vpop.f32.mrb[0].mxu0
    %302 = vmatprep.mubr.bf16.mxu0 0
    %303 = vmatmul.mubr.bf16.gmra.mrb[0].mxu0 %v247
    %v304 = vpop.f32.mrb[0].mxu0
    %v305 = vadd.f32 0.0, %v304
    %v306 = vpop.f32.mrb[0].mxu0
    %v307 = vpop.f32.mrb[0].mxu0
    %v308 = vadd.f32 0.0, %v307
    %v309 = vpop.f32.mrb[0].mxu0
    %310 = vmatprep.mubr.bf16.mxu0 0
    %311 = vmatmul.mubr.bf16.gmra.mrb[0].mxu0 %v248
    %v312 = vpop.f32.mrb[0].mxu0
    %v313 = vadd.f32 0.0, %v312
    %v314 = vpop.f32.mrb[0].mxu0
    %v315 = vpop.f32.mrb[0].mxu0
    %v316 = vadd.f32 0.0, %v315
    %v317 = vpop.f32.mrb[0].mxu0
    %318 = vmatprep.mubr.bf16.mxu0 0
    %319 = vmatmul.mubr.bf16.gmra.mrb[0].mxu0 %v249
    %v320 = vpop.f32.mrb[0].mxu0
    %v321 = vadd.f32 0.0, %v320
    %v322 = vpop.f32.mrb[0].mxu0
    %v323 = vpop.f32.mrb[0].mxu0
    %v324 = vadd.f32 0.0, %v323
    %v325 = vpop.f32.mrb[0].mxu0
    %326 = vmatprep.mubr.bf16.mxu0 0
    %327 = vmatmul.mubr.bf16.gmra.mrb[0].mxu0 %v250
    %v328 = vpop.f32.mrb[0].mxu0
    %v329 = vadd.f32 0.0, %v328
    %v330 = vpop.f32.mrb[0].mxu0
    %v331 = vpop.f32.mrb[0].mxu0
    %v332 = vadd.f32 0.0, %v331
    %v333 = vpop.f32.mrb[0].mxu0
    %334 = vmatprep.mubr.bf16.mxu0 0
    %335 = vmatmul.mubr.bf16.gmra.mrb[0].mxu0 %v251
    %v336 = vpop.f32.mrb[0].mxu0
    %v337 = vadd.f32 0.0, %v336
    %v338 = vpop.f32.mrb[0].mxu0
    %v339 = vpop.f32.mrb[0].mxu0
    %v340 = vadd.f32 0.0, %v339
    %v341 = vpop.f32.mrb[0].mxu0
    %342 = vmatprep.mubr.bf16.mxu0 0
    %343 = vmatmul.mubr.bf16.gmra.mrb[0].mxu0 %v252
    %v344 = vpop.f32.mrb[0].mxu0
    %v345 = vadd.f32 0.0, %v344
    %v346 = vpop.f32.mrb[0].mxu0
    %v347 = vpop.f32.mrb[0].mxu0
    %v348 = vadd.f32 0.0, %v347
    %v349 = vpop.f32.mrb[0].mxu0
    %350 = vmatprep.mubr.bf16.mxu0 0
    %351 = vmatmul.mubr.bf16.gmra.mrb[0].mxu0 %v253
    %v352 = vpop.f32.mrb[0].mxu0
    %v353 = vadd.f32 0.0, %v352
    %v354 = vpop.f32.mrb[0].mxu0
    %v355 = vpop.f32.mrb[0].mxu0
    %v356 = vadd.f32 0.0, %v355
    %v357 = vpop.f32.mrb[0].mxu0
    %358 = vdwg.mxu0
    %s359 = sld [smem:[#allocation2]]
    %s360 = sadd.f32 %s359, 1.0
    %v361 = vstv %s360
    %v362 = vmul.f32 %v361, %v174
    %v363 = vmul.f32 %v361, %v175
    %v364 = vmul.f32 %v361, %v176
    %v365 = vmul.f32 %v361, %v177
    %v366 = vmul.f32 %v361, %v178
    %v367 = vmul.f32 %v361, %v179
    %v368 = vmul.f32 %v361, %v180
    %v369 = vmul.f32 %v361, %v181
    %v370 = vmul.f32 %v361, %v182
    %v371 = vmul.f32 %v361, %v183
    %v372 = vmul.f32 %v361, %v184
    %v373 = vmul.f32 %v361, %v185
    %v374 = vmul.f32 %v361, %v186
    %v375 = vmul.f32 %v361, %v187
    %v376 = vmul.f32 %v361, %v188
    %v377 = vmul.f32 %v361, %v189
    %v378 = vadd.f32 %v362, %v297
    %v379 = vadd.f32 %v363, %v300
    %v380 = vadd.f32 %v364, %v305
    %v381 = vadd.f32 %v365, %v308
    %v382 = vadd.f32 %v366, %v313
    %v383 = vadd.f32 %v367, %v316
    %v384 = vadd.f32 %v368, %v321
    %v385 = vadd.f32 %v369, %v324
    %v386 = vadd.f32 %v370, %v329
    %v387 = vadd.f32 %v371, %v332
    %v388 = vadd.f32 %v372, %v337
    %v389 = vadd.f32 %v373, %v340
    %v390 = vadd.f32 %v374, %v345
    %v391 = vadd.f32 %v375, %v348
    %v392 = vadd.f32 %v376, %v353
    %v393 = vadd.f32 %v377, %v356
    %v394 = vpack.c.bf16 %v379, %v378
    %v395 = vpack.c.bf16 %v381, %v380
    %v396 = vpack.c.bf16 %v383, %v382
    %v397 = vpack.c.bf16 %v385, %v384
    %v398 = vpack.c.bf16 %v387, %v386
    %v399 = vpack.c.bf16 %v389, %v388
    %v400 = vpack.c.bf16 %v391, %v390
    %v401 = vpack.c.bf16 %v393, %v392
    %v402 = vld [vmem:[#allocation10] sm:$0xf]
    %v403 = vld [vmem:[#allocation10 + $0x4] sm:$0xf]
    %v404 = vld [vmem:[#allocation10 + $0x8] sm:$0xf]
    %v405 = vld [vmem:[#allocation10 + $0xc] sm:$0xf]
    %v406 = vld [vmem:[#allocation10 + $0x10] sm:$0xf]
    %v407 = vld [vmem:[#allocation10 + $0x14] sm:$0xf]
    %v408 = vld [vmem:[#allocation10 + $0x18] sm:$0xf]
    %v409 = vld [vmem:[#allocation10 + $0x1c] sm:$0xf]
    %v410 = vld [vmem:[#allocation10 + $0x20] sm:$0xf]
    %v411 = vld [vmem:[#allocation10 + $0x24] sm:$0xf]
    %v412 = vld [vmem:[#allocation10 + $0x28] sm:$0xf]
    %v413 = vld [vmem:[#allocation10 + $0x2c] sm:$0xf]
    %v414 = vld [vmem:[#allocation10 + $0x30] sm:$0xf]
    %v415 = vld [vmem:[#allocation10 + $0x34] sm:$0xf]
    %v416 = vld [vmem:[#allocation10 + $0x38] sm:$0xf]
    %v417 = vld [vmem:[#allocation10 + $0x3c] sm:$0xf]
    %v418 = vld [vmem:[%s6] sm:$0x1]
    %v420 = vlaneseq
    %v421 = vshrl.u32 %v420, 7
    %v422 = vsub.s32 0, %v421
    %v423 = vrot.slane %v418, %v422
    %v441 = vunpack.c.l.b16 %v402
    %v442 = vunpack.c.l.b16 %v403
    %v443 = vunpack.c.l.b16 %v404
    %v444 = vunpack.c.l.b16 %v405
    %v445 = vunpack.c.l.b16 %v406
    %v446 = vunpack.c.l.b16 %v407
    %v447 = vunpack.c.l.b16 %v408
    %v448 = vunpack.c.l.b16 %v409
    %v449 = vunpack.c.l.b16 %v410
    %v450 = vunpack.c.l.b16 %v411
    %v451 = vunpack.c.l.b16 %v412
    %v452 = vunpack.c.l.b16 %v413
    %v453 = vunpack.c.l.b16 %v414
    %v454 = vunpack.c.l.b16 %v415
    %v455 = vunpack.c.l.b16 %v416
    %v456 = vunpack.c.l.b16 %v417
    %v457 = vpack.c.b16 %v442, %v441
    %v458 = vpack.c.b16 %v444, %v443
    %v459 = vpack.c.b16 %v446, %v445
    %v460 = vpack.c.b16 %v448, %v447
    %v461 = vpack.c.b16 %v450, %v449
    %v462 = vpack.c.b16 %v452, %v451
    %v463 = vpack.c.b16 %v454, %v453
    %v464 = vpack.c.b16 %v456, %v455
    %473 = vmatprep.subr.bf16.mxu0 0
    %474 = vmatpush1.bf16.msra.mxu0 %v457
    %475 = vmatprep.subr.bf16.mxu0 0
    %476 = vmatpush1.bf16.msra.mxu0 %v458
    %477 = vmatprep.subr.bf16.mxu0 0
    %478 = vmatpush1.bf16.msra.mxu0 %v459
    %479 = vmatprep.subr.bf16.mxu0 0
    %480 = vmatpush1.bf16.msra.mxu0 %v460
    %481 = vmatprep.subr.bf16.mxu0 0
    %482 = vmatpush1.bf16.msra.mxu0 %v461
    %483 = vmatprep.subr.bf16.mxu0 0
    %484 = vmatpush1.bf16.msra.mxu0 %v462
    %485 = vmatprep.subr.bf16.mxu0 0
    %486 = vmatpush1.bf16.msra.mxu0 %v463
    %487 = vmatprep.subr.bf16.mxu0 0
    %488 = vmatpush1.bf16.msra.mxu0 %v464
    %489 = vmatprep.subr.bf16.mxu0 0
    %490 = vmatpush1.bf16.msra.mxu0 0
    %491 = vmatprep.subr.bf16.mxu0 0
    %492 = vmatpush1.bf16.msra.mxu0 0
    %493 = vmatprep.subr.bf16.mxu0 0
    %494 = vmatpush1.bf16.msra.mxu0 0
    %495 = vmatprep.subr.bf16.mxu0 0
    %496 = vmatpush1.bf16.msra.mxu0 0
    %497 = vmatprep.subr.bf16.mxu0 0
    %498 = vmatpush1.bf16.msra.mxu0 0
    %499 = vmatprep.subr.bf16.mxu0 0
    %500 = vmatpush1.bf16.msra.mxu0 0
    %501 = vmatprep.subr.bf16.mxu0 0
    %502 = vmatpush1.bf16.msra.mxu0 0
    %503 = vmatprep.subr.bf16.mxu0 0
    %504 = vmatpush1.bf16.msra.mxu0 0
    %505 = vmatprep.mubr.bf16.mxu0 0
    %506 = vmatmul.mubr.bf16.gmra.mrb[0].mxu0 %v394
    %v507 = vpop.f32.mrb[0].mxu0
    %v508 = vadd.f32 %v423, %v507
    %v509 = vpop.f32.mrb[0].mxu0
    %v510 = vpop.f32.mrb[0].mxu0
    %v511 = vadd.f32 %v423, %v510
    %v512 = vpop.f32.mrb[0].mxu0
    %513 = vmatprep.mubr.bf16.mxu0 0
    %514 = vmatmul.mubr.bf16.gmra.mrb[0].mxu0 %v395
    %v515 = vpop.f32.mrb[0].mxu0
    %v516 = vadd.f32 %v423, %v515
    %v517 = vpop.f32.mrb[0].mxu0
    %v518 = vpop.f32.mrb[0].mxu0
    %v519 = vadd.f32 %v423, %v518
    %v520 = vpop.f32.mrb[0].mxu0
    %521 = vmatprep.mubr.bf16.mxu0 0
    %522 = vmatmul.mubr.bf16.gmra.mrb[0].mxu0 %v396
    %v523 = vpop.f32.mrb[0].mxu0
    %v524 = vadd.f32 %v423, %v523
    %v525 = vpop.f32.mrb[0].mxu0
    %v526 = vpop.f32.mrb[0].mxu0
    %v527 = vadd.f32 %v423, %v526
    %v528 = vpop.f32.mrb[0].mxu0
    %529 = vmatprep.mubr.bf16.mxu0 0
    %530 = vmatmul.mubr.bf16.gmra.mrb[0].mxu0 %v397
    %v531 = vpop.f32.mrb[0].mxu0
    %v532 = vadd.f32 %v423, %v531
    %v533 = vpop.f32.mrb[0].mxu0
    %v534 = vpop.f32.mrb[0].mxu0
    %v535 = vadd.f32 %v423, %v534
    %v536 = vpop.f32.mrb[0].mxu0
    %537 = vmatprep.mubr.bf16.mxu0 0
    %538 = vmatmul.mubr.bf16.gmra.mrb[0].mxu0 %v398
    %v539 = vpop.f32.mrb[0].mxu0
    %v540 = vadd.f32 %v423, %v539
    %v541 = vpop.f32.mrb[0].mxu0
    %v542 = vpop.f32.mrb[0].mxu0
    %v543 = vadd.f32 %v423, %v542
    %v544 = vpop.f32.mrb[0].mxu0
    %545 = vmatprep.mubr.bf16.mxu0 0
    %546 = vmatmul.mubr.bf16.gmra.mrb[0].mxu0 %v399
    %v547 = vpop.f32.mrb[0].mxu0
    %v548 = vadd.f32 %v423, %v547
    %v549 = vpop.f32.mrb[0].mxu0
    %v550 = vpop.f32.mrb[0].mxu0
    %v551 = vadd.f32 %v423, %v550
    %v552 = vpop.f32.mrb[0].mxu0
    %553 = vmatprep.mubr.bf16.mxu0 0
    %554 = vmatmul.mubr.bf16.gmra.mrb[0].mxu0 %v400
    %v555 = vpop.f32.mrb[0].mxu0
    %v556 = vadd.f32 %v423, %v555
    %v557 = vpop.f32.mrb[0].mxu0
    %v558 = vpop.f32.mrb[0].mxu0
    %v559 = vadd.f32 %v423, %v558
    %v560 = vpop.f32.mrb[0].mxu0
    %561 = vmatprep.mubr.bf16.mxu0 0
    %562 = vmatmul.mubr.bf16.gmra.mrb[0].mxu0 %v401
    %v563 = vpop.f32.mrb[0].mxu0
    %v564 = vadd.f32 %v423, %v563
    %v565 = vpop.f32.mrb[0].mxu0
    %v566 = vpop.f32.mrb[0].mxu0
    %v567 = vadd.f32 %v423, %v566
    %v568 = vpop.f32.mrb[0].mxu0
    %569 = vdwg.mxu0
    %v570 = vmax.f32 %v508, 0.0
    %v571 = vmax.f32 %v511, 0.0
    %v572 = vmax.f32 %v516, 0.0
    %v573 = vmax.f32 %v519, 0.0
    %v574 = vmax.f32 %v524, 0.0
    %v575 = vmax.f32 %v527, 0.0
    %v576 = vmax.f32 %v532, 0.0
    %v577 = vmax.f32 %v535, 0.0
    %v578 = vmax.f32 %v540, 0.0
    %v579 = vmax.f32 %v543, 0.0
    %v580 = vmax.f32 %v548, 0.0
    %v581 = vmax.f32 %v551, 0.0
    %v582 = vmax.f32 %v556, 0.0
    %v583 = vmax.f32 %v559, 0.0
    %v584 = vmax.f32 %v564, 0.0
    %v585 = vmax.f32 %v567, 0.0
    %v586 = vpack.c.bf16 %v571, %v570
    %v587 = vpack.c.bf16 %v573, %v572
    %v588 = vpack.c.bf16 %v575, %v574
    %v589 = vpack.c.bf16 %v577, %v576
    %v590 = vpack.c.bf16 %v579, %v578
    %v591 = vpack.c.bf16 %v581, %v580
    %v592 = vpack.c.bf16 %v583, %v582
    %v593 = vpack.c.bf16 %v585, %v584
    %v594 = vld [vmem:[#allocation12] sm:$0xf]
    %v595 = vld [vmem:[#allocation12 + $0x4] sm:$0xf]
    %v596 = vld [vmem:[#allocation12 + $0x8] sm:$0xf]
    %v597 = vld [vmem:[#allocation12 + $0xc] sm:$0xf]
    %v598 = vld [vmem:[#allocation12 + $0x10] sm:$0xf]
    %v599 = vld [vmem:[#allocation12 + $0x14] sm:$0xf]
    %v600 = vld [vmem:[#allocation12 + $0x18] sm:$0xf]
    %v601 = vld [vmem:[#allocation12 + $0x1c] sm:$0xf]
    %v602 = vld [vmem:[#allocation12 + $0x20] sm:$0xf]
    %v603 = vld [vmem:[#allocation12 + $0x24] sm:$0xf]
    %v604 = vld [vmem:[#allocation12 + $0x28] sm:$0xf]
    %v605 = vld [vmem:[#allocation12 + $0x2c] sm:$0xf]
    %v606 = vld [vmem:[#allocation12 + $0x30] sm:$0xf]
    %v607 = vld [vmem:[#allocation12 + $0x34] sm:$0xf]
    %v608 = vld [vmem:[#allocation12 + $0x38] sm:$0xf]
    %v609 = vld [vmem:[#allocation12 + $0x3c] sm:$0xf]
    %v610 = vld [vmem:[%s8] sm:$0x1]
    %v612 = vlaneseq
    %v613 = vshrl.u32 %v612, 7
    %v614 = vsub.s32 0, %v613
    %v615 = vrot.slane %v610, %v614
    %v633 = vunpack.c.l.b16 %v594
    %v634 = vunpack.c.l.b16 %v595
    %v635 = vunpack.c.l.b16 %v596
    %v636 = vunpack.c.l.b16 %v597
    %v637 = vunpack.c.l.b16 %v598
    %v638 = vunpack.c.l.b16 %v599
    %v639 = vunpack.c.l.b16 %v600
    %v640 = vunpack.c.l.b16 %v601
    %v641 = vunpack.c.l.b16 %v602
    %v642 = vunpack.c.l.b16 %v603
    %v643 = vunpack.c.l.b16 %v604
    %v644 = vunpack.c.l.b16 %v605
    %v645 = vunpack.c.l.b16 %v606
    %v646 = vunpack.c.l.b16 %v607
    %v647 = vunpack.c.l.b16 %v608
    %v648 = vunpack.c.l.b16 %v609
    %v649 = vpack.c.b16 %v634, %v633
    %v650 = vpack.c.b16 %v636, %v635
    %v651 = vpack.c.b16 %v638, %v637
    %v652 = vpack.c.b16 %v640, %v639
    %v653 = vpack.c.b16 %v642, %v641
    %v654 = vpack.c.b16 %v644, %v643
    %v655 = vpack.c.b16 %v646, %v645
    %v656 = vpack.c.b16 %v648, %v647
    %665 = vmatprep.subr.bf16.mxu0 0
    %666 = vmatpush1.bf16.msra.mxu0 %v649
    %667 = vmatprep.subr.bf16.mxu0 0
    %668 = vmatpush1.bf16.msra.mxu0 %v650
    %669 = vmatprep.subr.bf16.mxu0 0
    %670 = vmatpush1.bf16.msra.mxu0 %v651
    %671 = vmatprep.subr.bf16.mxu0 0
    %672 = vmatpush1.bf16.msra.mxu0 %v652
    %673 = vmatprep.subr.bf16.mxu0 0
    %674 = vmatpush1.bf16.msra.mxu0 %v653
    %675 = vmatprep.subr.bf16.mxu0 0
    %676 = vmatpush1.bf16.msra.mxu0 %v654
    %677 = vmatprep.subr.bf16.mxu0 0
    %678 = vmatpush1.bf16.msra.mxu0 %v655
    %679 = vmatprep.subr.bf16.mxu0 0
    %680 = vmatpush1.bf16.msra.mxu0 %v656
    %681 = vmatprep.subr.bf16.mxu0 0
    %682 = vmatpush1.bf16.msra.mxu0 0
    %683 = vmatprep.subr.bf16.mxu0 0
    %684 = vmatpush1.bf16.msra.mxu0 0
    %685 = vmatprep.subr.bf16.mxu0 0
    %686 = vmatpush1.bf16.msra.mxu0 0
    %687 = vmatprep.subr.bf16.mxu0 0
    %688 = vmatpush1.bf16.msra.mxu0 0
    %689 = vmatprep.subr.bf16.mxu0 0
    %690 = vmatpush1.bf16.msra.mxu0 0
    %691 = vmatprep.subr.bf16.mxu0 0
    %692 = vmatpush1.bf16.msra.mxu0 0
    %693 = vmatprep.subr.bf16.mxu0 0
    %694 = vmatpush1.bf16.msra.mxu0 0
    %695 = vmatprep.subr.bf16.mxu0 0
    %696 = vmatpush1.bf16.msra.mxu0 0
    %697 = vmatprep.mubr.bf16.mxu0 0
    %698 = vmatmul.mubr.bf16.gmra.mrb[0].mxu0 %v586
    %v699 = vpop.f32.mrb[0].mxu0
    %v700 = vadd.f32 %v615, %v699
    %v701 = vpop.f32.mrb[0].mxu0
    %v702 = vpop.f32.mrb[0].mxu0
    %v703 = vadd.f32 %v615, %v702
    %v704 = vpop.f32.mrb[0].mxu0
    %705 = vmatprep.mubr.bf16.mxu0 0
    %706 = vmatmul.mubr.bf16.gmra.mrb[0].mxu0 %v587
    %v707 = vpop.f32.mrb[0].mxu0
    %v708 = vadd.f32 %v615, %v707
    %v709 = vpop.f32.mrb[0].mxu0
    %v710 = vpop.f32.mrb[0].mxu0
    %v711 = vadd.f32 %v615, %v710
    %v712 = vpop.f32.mrb[0].mxu0
    %713 = vmatprep.mubr.bf16.mxu0 0
    %714 = vmatmul.mubr.bf16.gmra.mrb[0].mxu0 %v588
    %v715 = vpop.f32.mrb[0].mxu0
    %v716 = vadd.f32 %v615, %v715
    %v717 = vpop.f32.mrb[0].mxu0
    %v718 = vpop.f32.mrb[0].mxu0
    %v719 = vadd.f32 %v615, %v718
    %v720 = vpop.f32.mrb[0].mxu0
    %721 = vmatprep.mubr.bf16.mxu0 0
    %722 = vmatmul.mubr.bf16.gmra.mrb[0].mxu0 %v589
    %v723 = vpop.f32.mrb[0].mxu0
    %v724 = vadd.f32 %v615, %v723
    %v725 = vpop.f32.mrb[0].mxu0
    %v726 = vpop.f32.mrb[0].mxu0
    %v727 = vadd.f32 %v615, %v726
    %v728 = vpop.f32.mrb[0].mxu0
    %729 = vmatprep.mubr.bf16.mxu0 0
    %730 = vmatmul.mubr.bf16.gmra.mrb[0].mxu0 %v590
    %v731 = vpop.f32.mrb[0].mxu0
    %v732 = vadd.f32 %v615, %v731
    %v733 = vpop.f32.mrb[0].mxu0
    %v734 = vpop.f32.mrb[0].mxu0
    %v735 = vadd.f32 %v615, %v734
    %v736 = vpop.f32.mrb[0].mxu0
    %737 = vmatprep.mubr.bf16.mxu0 0
    %738 = vmatmul.mubr.bf16.gmra.mrb[0].mxu0 %v591
    %v739 = vpop.f32.mrb[0].mxu0
    %v740 = vadd.f32 %v615, %v739
    %v741 = vpop.f32.mrb[0].mxu0
    %v742 = vpop.f32.mrb[0].mxu0
    %v743 = vadd.f32 %v615, %v742
    %v744 = vpop.f32.mrb[0].mxu0
    %745 = vmatprep.mubr.bf16.mxu0 0
    %746 = vmatmul.mubr.bf16.gmra.mrb[0].mxu0 %v592
    %v747 = vpop.f32.mrb[0].mxu0
    %v748 = vadd.f32 %v615, %v747
    %v749 = vpop.f32.mrb[0].mxu0
    %v750 = vpop.f32.mrb[0].mxu0
    %v751 = vadd.f32 %v615, %v750
    %v752 = vpop.f32.mrb[0].mxu0
    %753 = vmatprep.mubr.bf16.mxu0 0
    %754 = vmatmul.mubr.bf16.gmra.mrb[0].mxu0 %v593
    %v755 = vpop.f32.mrb[0].mxu0
    %v756 = vadd.f32 %v615, %v755
    %v757 = vpop.f32.mrb[0].mxu0
    %v758 = vpop.f32.mrb[0].mxu0
    %v759 = vadd.f32 %v615, %v758
    %v760 = vpop.f32.mrb[0].mxu0
    %761 = vdwg.mxu0
    %v762 = vmax.f32 %v700, 0.0
    %v763 = vmax.f32 %v703, 0.0
    %v764 = vmax.f32 %v708, 0.0
    %v765 = vmax.f32 %v711, 0.0
    %v766 = vmax.f32 %v716, 0.0
    %v767 = vmax.f32 %v719, 0.0
    %v768 = vmax.f32 %v724, 0.0
    %v769 = vmax.f32 %v727, 0.0
    %v770 = vmax.f32 %v732, 0.0
    %v771 = vmax.f32 %v735, 0.0
    %v772 = vmax.f32 %v740, 0.0
    %v773 = vmax.f32 %v743, 0.0
    %v774 = vmax.f32 %v748, 0.0
    %v775 = vmax.f32 %v751, 0.0
    %v776 = vmax.f32 %v756, 0.0
    %v777 = vmax.f32 %v759, 0.0
    %v778 = vld [vmem:[%s9] sm:$0x1]
    %v780 = vlaneseq
    %v781 = vshrl.u32 %v780, 7
    %v782 = vsub.s32 0, %v781
    %v783 = vrot.slane %v778, %v782
    %v785 = vmul.f32 %v762, %v783
    %v786 = vmul.f32 %v763, %v783
    %v787 = vmul.f32 %v764, %v783
    %v788 = vmul.f32 %v765, %v783
    %v789 = vmul.f32 %v766, %v783
    %v790 = vmul.f32 %v767, %v783
    %v791 = vmul.f32 %v768, %v783
    %v792 = vmul.f32 %v769, %v783
    %v793 = vmul.f32 %v770, %v783
    %v794 = vmul.f32 %v771, %v783
    %v795 = vmul.f32 %v772, %v783
    %v796 = vmul.f32 %v773, %v783
    %v797 = vmul.f32 %v774, %v783
    %v798 = vmul.f32 %v775, %v783
    %v799 = vmul.f32 %v776, %v783
    %v800 = vmul.f32 %v777, %v783
    %v801 = vld [vmem:[%s10] sm:$0x1]
    %v803 = vlaneseq
    %v804 = vshrl.u32 %v803, 7
    %v805 = vsub.s32 0, %v804
    %v806 = vrot.slane %v801, %v805
    %v808 = vadd.f32 %v785, %v806
    %v809 = vadd.f32 %v786, %v806
    %v810 = vadd.f32 %v787, %v806
    %v811 = vadd.f32 %v788, %v806
    %v812 = vadd.f32 %v789, %v806
    %v813 = vadd.f32 %v790, %v806
    %v814 = vadd.f32 %v791, %v806
    %v815 = vadd.f32 %v792, %v806
    %v816 = vadd.f32 %v793, %v806
    %v817 = vadd.f32 %v794, %v806
    %v818 = vadd.f32 %v795, %v806
    %v819 = vadd.f32 %v796, %v806
    %v820 = vadd.f32 %v797, %v806
    %v821 = vadd.f32 %v798, %v806
    %v822 = vadd.f32 %v799, %v806
    %v823 = vadd.f32 %v800, %v806
    %v824 = vmul.f32 %v808, %v190
    %v825 = vmul.f32 %v809, %v191
    %v826 = vmul.f32 %v810, %v192
    %v827 = vmul.f32 %v811, %v193
    %v828 = vmul.f32 %v812, %v194
    %v829 = vmul.f32 %v813, %v195
    %v830 = vmul.f32 %v814, %v196
    %v831 = vmul.f32 %v815, %v197
    %v832 = vmul.f32 %v816, %v198
    %v833 = vmul.f32 %v817, %v199
    %v834 = vmul.f32 %v818, %v200
    %v835 = vmul.f32 %v819, %v201
    %v836 = vmul.f32 %v820, %v202
    %v837 = vmul.f32 %v821, %v203
    %v838 = vmul.f32 %v822, %v204
    %v839 = vmul.f32 %v823, %v205
    %v840 = vpack.c.bf16 %v825, %v824
    %v841 = vpack.c.bf16 %v827, %v826
    %v842 = vpack.c.bf16 %v829, %v828
    %v843 = vpack.c.bf16 %v831, %v830
    %v844 = vpack.c.bf16 %v833, %v832
    %v845 = vpack.c.bf16 %v835, %v834
    %v846 = vpack.c.bf16 %v837, %v836
    %v847 = vpack.c.bf16 %v839, %v838
    %848 = vmatprep.subr.bf16.mxu0 0
    %849 = vmatpush1.bf16.msra.mxu0 %v840
    %850 = vmatprep.subr.bf16.mxu0 0
    %851 = vmatpush1.bf16.msra.mxu0 %v841
    %852 = vmatprep.subr.bf16.mxu0 0
    %853 = vmatpush1.bf16.msra.mxu0 %v842
    %854 = vmatprep.subr.bf16.mxu0 0
    %855 = vmatpush1.bf16.msra.mxu0 %v843
    %856 = vmatprep.subr.bf16.mxu0 0
    %857 = vmatpush1.bf16.msra.mxu0 %v844
    %858 = vmatprep.subr.bf16.mxu0 0
    %859 = vmatpush1.bf16.msra.mxu0 %v845
    %860 = vmatprep.subr.bf16.mxu0 0
    %861 = vmatpush1.bf16.msra.mxu0 %v846
    %862 = vmatprep.subr.bf16.mxu0 0
    %863 = vmatpush1.bf16.msra.mxu0 %v847
    %864 = vmatprep.subr.bf16.mxu0 0
    %865 = vmatpush1.bf16.msra.mxu0 0
    %866 = vmatprep.subr.bf16.mxu0 0
    %867 = vmatpush1.bf16.msra.mxu0 0
    %868 = vmatprep.subr.bf16.mxu0 0
    %869 = vmatpush1.bf16.msra.mxu0 0
    %870 = vmatprep.subr.bf16.mxu0 0
    %871 = vmatpush1.bf16.msra.mxu0 0
    %872 = vmatprep.subr.bf16.mxu0 0
    %873 = vmatpush1.bf16.msra.mxu0 0
    %874 = vmatprep.subr.bf16.mxu0 0
    %875 = vmatpush1.bf16.msra.mxu0 0
    %876 = vmatprep.subr.bf16.mxu0 0
    %877 = vmatpush1.bf16.msra.mxu0 0
    %878 = vmatprep.subr.bf16.mxu0 0
    %879 = vmatpush1.bf16.msra.mxu0 0
    %880 = vmatprep.mubr.bf16.mxu0 0
    %881 = vmatmul.mubr.bf16.gmra.mrb[0].mxu0 %v246
    %v882 = vpop.f32.mrb[0].mxu0
    %v883 = vadd.f32 0.0, %v882
    %v884 = vpop.f32.mrb[0].mxu0
    %v885 = vpop.f32.mrb[0].mxu0
    %v886 = vadd.f32 0.0, %v885
    %v887 = vpop.f32.mrb[0].mxu0
    %888 = vmatprep.mubr.bf16.mxu0 0
    %889 = vmatmul.mubr.bf16.gmra.mrb[0].mxu0 %v247
    %v890 = vpop.f32.mrb[0].mxu0
    %v891 = vadd.f32 0.0, %v890
    %v892 = vpop.f32.mrb[0].mxu0
    %v893 = vpop.f32.mrb[0].mxu0
    %v894 = vadd.f32 0.0, %v893
    %v895 = vpop.f32.mrb[0].mxu0
    %896 = vmatprep.mubr.bf16.mxu0 0
    %897 = vmatmul.mubr.bf16.gmra.mrb[0].mxu0 %v248
    %v898 = vpop.f32.mrb[0].mxu0
    %v899 = vadd.f32 0.0, %v898
    %v900 = vpop.f32.mrb[0].mxu0
    %v901 = vpop.f32.mrb[0].mxu0
    %v902 = vadd.f32 0.0, %v901
    %v903 = vpop.f32.mrb[0].mxu0
    %904 = vmatprep.mubr.bf16.mxu0 0
    %905 = vmatmul.mubr.bf16.gmra.mrb[0].mxu0 %v249
    %v906 = vpop.f32.mrb[0].mxu0
    %v907 = vadd.f32 0.0, %v906
    %v908 = vpop.f32.mrb[0].mxu0
    %v909 = vpop.f32.mrb[0].mxu0
    %v910 = vadd.f32 0.0, %v909
    %v911 = vpop.f32.mrb[0].mxu0
    %912 = vmatprep.mubr.bf16.mxu0 0
    %913 = vmatmul.mubr.bf16.gmra.mrb[0].mxu0 %v250
    %v914 = vpop.f32.mrb[0].mxu0
    %v915 = vadd.f32 0.0, %v914
    %v916 = vpop.f32.mrb[0].mxu0
    %v917 = vpop.f32.mrb[0].mxu0
    %v918 = vadd.f32 0.0, %v917
    %v919 = vpop.f32.mrb[0].mxu0
    %920 = vmatprep.mubr.bf16.mxu0 0
    %921 = vmatmul.mubr.bf16.gmra.mrb[0].mxu0 %v251
    %v922 = vpop.f32.mrb[0].mxu0
    %v923 = vadd.f32 0.0, %v922
    %v924 = vpop.f32.mrb[0].mxu0
    %v925 = vpop.f32.mrb[0].mxu0
    %v926 = vadd.f32 0.0, %v925
    %v927 = vpop.f32.mrb[0].mxu0
    %928 = vmatprep.mubr.bf16.mxu0 0
    %929 = vmatmul.mubr.bf16.gmra.mrb[0].mxu0 %v252
    %v930 = vpop.f32.mrb[0].mxu0
    %v931 = vadd.f32 0.0, %v930
    %v932 = vpop.f32.mrb[0].mxu0
    %v933 = vpop.f32.mrb[0].mxu0
    %v934 = vadd.f32 0.0, %v933
    %v935 = vpop.f32.mrb[0].mxu0
    %936 = vmatprep.mubr.bf16.mxu0 0
    %937 = vmatmul.mubr.bf16.gmra.mrb[0].mxu0 %v253
    %v938 = vpop.f32.mrb[0].mxu0
    %v939 = vadd.f32 0.0, %v938
    %v940 = vpop.f32.mrb[0].mxu0
    %v941 = vpop.f32.mrb[0].mxu0
    %v942 = vadd.f32 0.0, %v941
    %v943 = vpop.f32.mrb[0].mxu0
    %944 = vdwg.mxu0
    %s945 = sld [smem:[#allocation2 + $0x1]]
    %s946 = sadd.f32 %s945, 1.0
    %v947 = vstv %s946
    %v948 = vmul.f32 %v947, %v824
    %v949 = vmul.f32 %v947, %v825
    %v950 = vmul.f32 %v947, %v826
    %v951 = vmul.f32 %v947, %v827
    %v952 = vmul.f32 %v947, %v828
    %v953 = vmul.f32 %v947, %v829
    %v954 = vmul.f32 %v947, %v830
    %v955 = vmul.f32 %v947, %v831
    %v956 = vmul.f32 %v947, %v832
    %v957 = vmul.f32 %v947, %v833
    %v958 = vmul.f32 %v947, %v834
    %v959 = vmul.f32 %v947, %v835
    %v960 = vmul.f32 %v947, %v836
    %v961 = vmul.f32 %v947, %v837
    %v962 = vmul.f32 %v947, %v838
    %v963 = vmul.f32 %v947, %v839
    %v964 = vadd.f32 %v948, %v883
    %v965 = vadd.f32 %v949, %v886
    %v966 = vadd.f32 %v950, %v891
    %v967 = vadd.f32 %v951, %v894
    %v968 = vadd.f32 %v952, %v899
    %v969 = vadd.f32 %v953, %v902
    %v970 = vadd.f32 %v954, %v907
    %v971 = vadd.f32 %v955, %v910
    %v972 = vadd.f32 %v956, %v915
    %v973 = vadd.f32 %v957, %v918
    %v974 = vadd.f32 %v958, %v923
    %v975 = vadd.f32 %v959, %v926
    %v976 = vadd.f32 %v960, %v931
    %v977 = vadd.f32 %v961, %v934
    %v978 = vadd.f32 %v962, %v939
    %v979 = vadd.f32 %v963, %v942
    %v980 = vpack.c.bf16 %v965, %v964
    %v981 = vpack.c.bf16 %v967, %v966
    %v982 = vpack.c.bf16 %v969, %v968
    %v983 = vpack.c.bf16 %v971, %v970
    %v984 = vpack.c.bf16 %v973, %v972
    %v985 = vpack.c.bf16 %v975, %v974
    %v986 = vpack.c.bf16 %v977, %v976
    %v987 = vpack.c.bf16 %v979, %v978
    %s988 = scalar_lea.vmem [#allocation10], 64
    %v989 = vld [vmem:[%s988] sm:$0xf]
    %v990 = vld [vmem:[%s988 + $0x4] sm:$0xf]
    %v991 = vld [vmem:[%s988 + $0x8] sm:$0xf]
    %v992 = vld [vmem:[%s988 + $0xc] sm:$0xf]
    %v993 = vld [vmem:[%s988 + $0x10] sm:$0xf]
    %v994 = vld [vmem:[%s988 + $0x14] sm:$0xf]
    %v995 = vld [vmem:[%s988 + $0x18] sm:$0xf]
    %v996 = vld [vmem:[%s988 + $0x1c] sm:$0xf]
    %v997 = vld [vmem:[%s988 + $0x20] sm:$0xf]
    %v998 = vld [vmem:[%s988 + $0x24] sm:$0xf]
    %v999 = vld [vmem:[%s988 + $0x28] sm:$0xf]
    %v1000 = vld [vmem:[%s988 + $0x2c] sm:$0xf]
    %v1001 = vld [vmem:[%s988 + $0x30] sm:$0xf]
    %v1002 = vld [vmem:[%s988 + $0x34] sm:$0xf]
    %v1003 = vld [vmem:[%s988 + $0x38] sm:$0xf]
    %v1004 = vld [vmem:[%s988 + $0x3c] sm:$0xf]
    %s1005 = scalar_lea.vmem %s6, 1
    %v1006 = vld [vmem:[%s1005] sm:$0x1]
    %v1008 = vlaneseq
    %v1009 = vshrl.u32 %v1008, 7
    %v1010 = vsub.s32 0, %v1009
    %v1011 = vrot.slane %v1006, %v1010
    %v1029 = vunpack.c.l.b16 %v989
    %v1030 = vunpack.c.l.b16 %v990
    %v1031 = vunpack.c.l.b16 %v991
    %v1032 = vunpack.c.l.b16 %v992
    %v1033 = vunpack.c.l.b16 %v993
    %v1034 = vunpack.c.l.b16 %v994
    %v1035 = vunpack.c.l.b16 %v995
    %v1036 = vunpack.c.l.b16 %v996
    %v1037 = vunpack.c.l.b16 %v997
    %v1038 = vunpack.c.l.b16 %v998
    %v1039 = vunpack.c.l.b16 %v999
    %v1040 = vunpack.c.l.b16 %v1000
    %v1041 = vunpack.c.l.b16 %v1001
    %v1042 = vunpack.c.l.b16 %v1002
    %v1043 = vunpack.c.l.b16 %v1003
    %v1044 = vunpack.c.l.b16 %v1004
    %v1045 = vpack.c.b16 %v1030, %v1029
    %v1046 = vpack.c.b16 %v1032, %v1031
    %v1047 = vpack.c.b16 %v1034, %v1033
    %v1048 = vpack.c.b16 %v1036, %v1035
    %v1049 = vpack.c.b16 %v1038, %v1037
    %v1050 = vpack.c.b16 %v1040, %v1039
    %v1051 = vpack.c.b16 %v1042, %v1041
    %v1052 = vpack.c.b16 %v1044, %v1043
    %1061 = vmatprep.subr.bf16.mxu0 0
    %1062 = vmatpush1.bf16.msra.mxu0 %v1045
    %1063 = vmatprep.subr.bf16.mxu0 0
    %1064 = vmatpush1.bf16.msra.mxu0 %v1046
    %1065 = vmatprep.subr.bf16.mxu0 0
    %1066 = vmatpush1.bf16.msra.mxu0 %v1047
    %1067 = vmatprep.subr.bf16.mxu0 0
    %1068 = vmatpush1.bf16.msra.mxu0 %v1048
    %1069 = vmatprep.subr.bf16.mxu0 0
    %1070 = vmatpush1.bf16.msra.mxu0 %v1049
    %1071 = vmatprep.subr.bf16.mxu0 0
    %1072 = vmatpush1.bf16.msra.mxu0 %v1050
    %1073 = vmatprep.subr.bf16.mxu0 0
    %1074 = vmatpush1.bf16.msra.mxu0 %v1051
    %1075 = vmatprep.subr.bf16.mxu0 0
    %1076 = vmatpush1.bf16.msra.mxu0 %v1052
    %1077 = vmatprep.subr.bf16.mxu0 0
    %1078 = vmatpush1.bf16.msra.mxu0 0
    %1079 = vmatprep.subr.bf16.mxu0 0
    %1080 = vmatpush1.bf16.msra.mxu0 0
    %1081 = vmatprep.subr.bf16.mxu0 0
    %1082 = vmatpush1.bf16.msra.mxu0 0
    %1083 = vmatprep.subr.bf16.mxu0 0
    %1084 = vmatpush1.bf16.msra.mxu0 0
    %1085 = vmatprep.subr.bf16.mxu0 0
    %1086 = vmatpush1.bf16.msra.mxu0 0
    %1087 = vmatprep.subr.bf16.mxu0 0
    %1088 = vmatpush1.bf16.msra.mxu0 0
    %1089 = vmatprep.subr.bf16.mxu0 0
    %1090 = vmatpush1.bf16.msra.mxu0 0
    %1091 = vmatprep.subr.bf16.mxu0 0
    %1092 = vmatpush1.bf16.msra.mxu0 0
    %1093 = vmatprep.mubr.bf16.mxu0 0
    %1094 = vmatmul.mubr.bf16.gmra.mrb[0].mxu0 %v980
    %v1095 = vpop.f32.mrb[0].mxu0
    %v1096 = vadd.f32 %v1011, %v1095
    %v1097 = vpop.f32.mrb[0].mxu0
    %v1098 = vpop.f32.mrb[0].mxu0
    %v1099 = vadd.f32 %v1011, %v1098
    %v1100 = vpop.f32.mrb[0].mxu0
    %1101 = vmatprep.mubr.bf16.mxu0 0
    %1102 = vmatmul.mubr.bf16.gmra.mrb[0].mxu0 %v981
    %v1103 = vpop.f32.mrb[0].mxu0
    %v1104 = vadd.f32 %v1011, %v1103
    %v1105 = vpop.f32.mrb[0].mxu0
    %v1106 = vpop.f32.mrb[0].mxu0
    %v1107 = vadd.f32 %v1011, %v1106
    %v1108 = vpop.f32.mrb[0].mxu0
    %1109 = vmatprep.mubr.bf16.mxu0 0
    %1110 = vmatmul.mubr.bf16.gmra.mrb[0].mxu0 %v982
    %v1111 = vpop.f32.mrb[0].mxu0
    %v1112 = vadd.f32 %v1011, %v1111
    %v1113 = vpop.f32.mrb[0].mxu0
    %v1114 = vpop.f32.mrb[0].mxu0
    %v1115 = vadd.f32 %v1011, %v1114
    %v1116 = vpop.f32.mrb[0].mxu0
    %1117 = vmatprep.mubr.bf16.mxu0 0
    %1118 = vmatmul.mubr.bf16.gmra.mrb[0].mxu0 %v983
    %v1119 = vpop.f32.mrb[0].mxu0
    %v1120 = vadd.f32 %v1011, %v1119
    %v1121 = vpop.f32.mrb[0].mxu0
    %v1122 = vpop.f32.mrb[0].mxu0
    %v1123 = vadd.f32 %v1011, %v1122
    %v1124 = vpop.f32.mrb[0].mxu0
    %1125 = vmatprep.mubr.bf16.mxu0 0
    %1126 = vmatmul.mubr.bf16.gmra.mrb[0].mxu0 %v984
    %v1127 = vpop.f32.mrb[0].mxu0
    %v1128 = vadd.f32 %v1011, %v1127
    %v1129 = vpop.f32.mrb[0].mxu0
    %v1130 = vpop.f32.mrb[0].mxu0
    %v1131 = vadd.f32 %v1011, %v1130
    %v1132 = vpop.f32.mrb[0].mxu0
    %1133 = vmatprep.mubr.bf16.mxu0 0
    %1134 = vmatmul.mubr.bf16.gmra.mrb[0].mxu0 %v985
    %v1135 = vpop.f32.mrb[0].mxu0
    %v1136 = vadd.f32 %v1011, %v1135
    %v1137 = vpop.f32.mrb[0].mxu0
    %v1138 = vpop.f32.mrb[0].mxu0
    %v1139 = vadd.f32 %v1011, %v1138
    %v1140 = vpop.f32.mrb[0].mxu0
    %1141 = vmatprep.mubr.bf16.mxu0 0
    %1142 = vmatmul.mubr.bf16.gmra.mrb[0].mxu0 %v986
    %v1143 = vpop.f32.mrb[0].mxu0
    %v1144 = vadd.f32 %v1011, %v1143
    %v1145 = vpop.f32.mrb[0].mxu0
    %v1146 = vpop.f32.mrb[0].mxu0
    %v1147 = vadd.f32 %v1011, %v1146
    %v1148 = vpop.f32.mrb[0].mxu0
    %1149 = vmatprep.mubr.bf16.mxu0 0
    %1150 = vmatmul.mubr.bf16.gmra.mrb[0].mxu0 %v987
    %v1151 = vpop.f32.mrb[0].mxu0
    %v1152 = vadd.f32 %v1011, %v1151
    %v1153 = vpop.f32.mrb[0].mxu0
    %v1154 = vpop.f32.mrb[0].mxu0
    %v1155 = vadd.f32 %v1011, %v1154
    %v1156 = vpop.f32.mrb[0].mxu0
    %1157 = vdwg.mxu0
    %v1158 = vmax.f32 %v1096, 0.0
    %v1159 = vmax.f32 %v1099, 0.0
    %v1160 = vmax.f32 %v1104, 0.0
    %v1161 = vmax.f32 %v1107, 0.0
    %v1162 = vmax.f32 %v1112, 0.0
    %v1163 = vmax.f32 %v1115, 0.0
    %v1164 = vmax.f32 %v1120, 0.0
    %v1165 = vmax.f32 %v1123, 0.0
    %v1166 = vmax.f32 %v1128, 0.0
    %v1167 = vmax.f32 %v1131, 0.0
    %v1168 = vmax.f32 %v1136, 0.0
    %v1169 = vmax.f32 %v1139, 0.0
    %v1170 = vmax.f32 %v1144, 0.0
    %v1171 = vmax.f32 %v1147, 0.0
    %v1172 = vmax.f32 %v1152, 0.0
    %v1173 = vmax.f32 %v1155, 0.0
    %v1174 = vpack.c.bf16 %v1159, %v1158
    %v1175 = vpack.c.bf16 %v1161, %v1160
    %v1176 = vpack.c.bf16 %v1163, %v1162
    %v1177 = vpack.c.bf16 %v1165, %v1164
    %v1178 = vpack.c.bf16 %v1167, %v1166
    %v1179 = vpack.c.bf16 %v1169, %v1168
    %v1180 = vpack.c.bf16 %v1171, %v1170
    %v1181 = vpack.c.bf16 %v1173, %v1172
    %s1182 = scalar_lea.vmem [#allocation12], 64
    %v1183 = vld [vmem:[%s1182] sm:$0xf]
    %v1184 = vld [vmem:[%s1182 + $0x4] sm:$0xf]
    %v1185 = vld [vmem:[%s1182 + $0x8] sm:$0xf]
    %v1186 = vld [vmem:[%s1182 + $0xc] sm:$0xf]
    %v1187 = vld [vmem:[%s1182 + $0x10] sm:$0xf]
    %v1188 = vld [vmem:[%s1182 + $0x14] sm:$0xf]
    %v1189 = vld [vmem:[%s1182 + $0x18] sm:$0xf]
    %v1190 = vld [vmem:[%s1182 + $0x1c] sm:$0xf]
    %v1191 = vld [vmem:[%s1182 + $0x20] sm:$0xf]
    %v1192 = vld [vmem:[%s1182 + $0x24] sm:$0xf]
    %v1193 = vld [vmem:[%s1182 + $0x28] sm:$0xf]
    %v1194 = vld [vmem:[%s1182 + $0x2c] sm:$0xf]
    %v1195 = vld [vmem:[%s1182 + $0x30] sm:$0xf]
    %v1196 = vld [vmem:[%s1182 + $0x34] sm:$0xf]
    %v1197 = vld [vmem:[%s1182 + $0x38] sm:$0xf]
    %v1198 = vld [vmem:[%s1182 + $0x3c] sm:$0xf]
    %s1199 = scalar_lea.vmem %s8, 1
    %v1200 = vld [vmem:[%s1199] sm:$0x1]
    %v1202 = vlaneseq
    %v1203 = vshrl.u32 %v1202, 7
    %v1204 = vsub.s32 0, %v1203
    %v1205 = vrot.slane %v1200, %v1204
    %v1223 = vunpack.c.l.b16 %v1183
    %v1224 = vunpack.c.l.b16 %v1184
    %v1225 = vunpack.c.l.b16 %v1185
    %v1226 = vunpack.c.l.b16 %v1186
    %v1227 = vunpack.c.l.b16 %v1187
    %v1228 = vunpack.c.l.b16 %v1188
    %v1229 = vunpack.c.l.b16 %v1189
    %v1230 = vunpack.c.l.b16 %v1190
    %v1231 = vunpack.c.l.b16 %v1191
    %v1232 = vunpack.c.l.b16 %v1192
    %v1233 = vunpack.c.l.b16 %v1193
    %v1234 = vunpack.c.l.b16 %v1194
    %v1235 = vunpack.c.l.b16 %v1195
    %v1236 = vunpack.c.l.b16 %v1196
    %v1237 = vunpack.c.l.b16 %v1197
    %v1238 = vunpack.c.l.b16 %v1198
    %v1239 = vpack.c.b16 %v1224, %v1223
    %v1240 = vpack.c.b16 %v1226, %v1225
    %v1241 = vpack.c.b16 %v1228, %v1227
    %v1242 = vpack.c.b16 %v1230, %v1229
    %v1243 = vpack.c.b16 %v1232, %v1231
    %v1244 = vpack.c.b16 %v1234, %v1233
    %v1245 = vpack.c.b16 %v1236, %v1235
    %v1246 = vpack.c.b16 %v1238, %v1237
    %1255 = vmatprep.subr.bf16.mxu0 0
    %1256 = vmatpush1.bf16.msra.mxu0 %v1239
    %1257 = vmatprep.subr.bf16.mxu0 0
    %1258 = vmatpush1.bf16.msra.mxu0 %v1240
    %1259 = vmatprep.subr.bf16.mxu0 0
    %1260 = vmatpush1.bf16.msra.mxu0 %v1241
    %1261 = vmatprep.subr.bf16.mxu0 0
    %1262 = vmatpush1.bf16.msra.mxu0 %v1242
    %1263 = vmatprep.subr.bf16.mxu0 0
    %1264 = vmatpush1.bf16.msra.mxu0 %v1243
    %1265 = vmatprep.subr.bf16.mxu0 0
    %1266 = vmatpush1.bf16.msra.mxu0 %v1244
    %1267 = vmatprep.subr.bf16.mxu0 0
    %1268 = vmatpush1.bf16.msra.mxu0 %v1245
    %1269 = vmatprep.subr.bf16.mxu0 0
    %1270 = vmatpush1.bf16.msra.mxu0 %v1246
    %1271 = vmatprep.subr.bf16.mxu0 0
    %1272 = vmatpush1.bf16.msra.mxu0 0
    %1273 = vmatprep.subr.bf16.mxu0 0
    %1274 = vmatpush1.bf16.msra.mxu0 0
    %1275 = vmatprep.subr.bf16.mxu0 0
    %1276 = vmatpush1.bf16.msra.mxu0 0
    %1277 = vmatprep.subr.bf16.mxu0 0
    %1278 = vmatpush1.bf16.msra.mxu0 0
    %1279 = vmatprep.subr.bf16.mxu0 0
    %1280 = vmatpush1.bf16.msra.mxu0 0
    %1281 = vmatprep.subr.bf16.mxu0 0
    %1282 = vmatpush1.bf16.msra.mxu0 0
    %1283 = vmatprep.subr.bf16.mxu0 0
    %1284 = vmatpush1.bf16.msra.mxu0 0
    %1285 = vmatprep.subr.bf16.mxu0 0
    %1286 = vmatpush1.bf16.msra.mxu0 0
    %1287 = vmatprep.mubr.bf16.mxu0 0
    %1288 = vmatmul.mubr.bf16.gmra.mrb[0].mxu0 %v1174
    %v1289 = vpop.f32.mrb[0].mxu0
    %v1290 = vadd.f32 %v1205, %v1289
    %v1291 = vpop.f32.mrb[0].mxu0
    %v1292 = vpop.f32.mrb[0].mxu0
    %v1293 = vadd.f32 %v1205, %v1292
    %v1294 = vpop.f32.mrb[0].mxu0
    %1295 = vmatprep.mubr.bf16.mxu0 0
    %1296 = vmatmul.mubr.bf16.gmra.mrb[0].mxu0 %v1175
    %v1297 = vpop.f32.mrb[0].mxu0
    %v1298 = vadd.f32 %v1205, %v1297
    %v1299 = vpop.f32.mrb[0].mxu0
    %v1300 = vpop.f32.mrb[0].mxu0
    %v1301 = vadd.f32 %v1205, %v1300
    %v1302 = vpop.f32.mrb[0].mxu0
    %1303 = vmatprep.mubr.bf16.mxu0 0
    %1304 = vmatmul.mubr.bf16.gmra.mrb[0].mxu0 %v1176
    %v1305 = vpop.f32.mrb[0].mxu0
    %v1306 = vadd.f32 %v1205, %v1305
    %v1307 = vpop.f32.mrb[0].mxu0
    %v1308 = vpop.f32.mrb[0].mxu0
    %v1309 = vadd.f32 %v1205, %v1308
    %v1310 = vpop.f32.mrb[0].mxu0
    %1311 = vmatprep.mubr.bf16.mxu0 0
    %1312 = vmatmul.mubr.bf16.gmra.mrb[0].mxu0 %v1177
    %v1313 = vpop.f32.mrb[0].mxu0
    %v1314 = vadd.f32 %v1205, %v1313
    %v1315 = vpop.f32.mrb[0].mxu0
    %v1316 = vpop.f32.mrb[0].mxu0
    %v1317 = vadd.f32 %v1205, %v1316
    %v1318 = vpop.f32.mrb[0].mxu0
    %1319 = vmatprep.mubr.bf16.mxu0 0
    %1320 = vmatmul.mubr.bf16.gmra.mrb[0].mxu0 %v1178
    %v1321 = vpop.f32.mrb[0].mxu0
    %v1322 = vadd.f32 %v1205, %v1321
    %v1323 = vpop.f32.mrb[0].mxu0
    %v1324 = vpop.f32.mrb[0].mxu0
    %v1325 = vadd.f32 %v1205, %v1324
    %v1326 = vpop.f32.mrb[0].mxu0
    %1327 = vmatprep.mubr.bf16.mxu0 0
    %1328 = vmatmul.mubr.bf16.gmra.mrb[0].mxu0 %v1179
    %v1329 = vpop.f32.mrb[0].mxu0
    %v1330 = vadd.f32 %v1205, %v1329
    %v1331 = vpop.f32.mrb[0].mxu0
    %v1332 = vpop.f32.mrb[0].mxu0
    %v1333 = vadd.f32 %v1205, %v1332
    %v1334 = vpop.f32.mrb[0].mxu0
    %1335 = vmatprep.mubr.bf16.mxu0 0
    %1336 = vmatmul.mubr.bf16.gmra.mrb[0].mxu0 %v1180
    %v1337 = vpop.f32.mrb[0].mxu0
    %v1338 = vadd.f32 %v1205, %v1337
    %v1339 = vpop.f32.mrb[0].mxu0
    %v1340 = vpop.f32.mrb[0].mxu0
    %v1341 = vadd.f32 %v1205, %v1340
    %v1342 = vpop.f32.mrb[0].mxu0
    %1343 = vmatprep.mubr.bf16.mxu0 0
    %1344 = vmatmul.mubr.bf16.gmra.mrb[0].mxu0 %v1181
    %v1345 = vpop.f32.mrb[0].mxu0
    %v1346 = vadd.f32 %v1205, %v1345
    %v1347 = vpop.f32.mrb[0].mxu0
    %v1348 = vpop.f32.mrb[0].mxu0
    %v1349 = vadd.f32 %v1205, %v1348
    %v1350 = vpop.f32.mrb[0].mxu0
    %1351 = vdwg.mxu0
    %v1352 = vmax.f32 %v1290, 0.0
    %v1353 = vmax.f32 %v1293, 0.0
    %v1354 = vmax.f32 %v1298, 0.0
    %v1355 = vmax.f32 %v1301, 0.0
    %v1356 = vmax.f32 %v1306, 0.0
    %v1357 = vmax.f32 %v1309, 0.0
    %v1358 = vmax.f32 %v1314, 0.0
    %v1359 = vmax.f32 %v1317, 0.0
    %v1360 = vmax.f32 %v1322, 0.0
    %v1361 = vmax.f32 %v1325, 0.0
    %v1362 = vmax.f32 %v1330, 0.0
    %v1363 = vmax.f32 %v1333, 0.0
    %v1364 = vmax.f32 %v1338, 0.0
    %v1365 = vmax.f32 %v1341, 0.0
    %v1366 = vmax.f32 %v1346, 0.0
    %v1367 = vmax.f32 %v1349, 0.0
    %s1368 = scalar_lea.vmem %s9, 1
    %v1369 = vld [vmem:[%s1368] sm:$0x1]
    %v1371 = vlaneseq
    %v1372 = vshrl.u32 %v1371, 7
    %v1373 = vsub.s32 0, %v1372
    %v1374 = vrot.slane %v1369, %v1373
    %v1376 = vmul.f32 %v1352, %v1374
    %v1377 = vmul.f32 %v1353, %v1374
    %v1378 = vmul.f32 %v1354, %v1374
    %v1379 = vmul.f32 %v1355, %v1374
    %v1380 = vmul.f32 %v1356, %v1374
    %v1381 = vmul.f32 %v1357, %v1374
    %v1382 = vmul.f32 %v1358, %v1374
    %v1383 = vmul.f32 %v1359, %v1374
    %v1384 = vmul.f32 %v1360, %v1374
    %v1385 = vmul.f32 %v1361, %v1374
    %v1386 = vmul.f32 %v1362, %v1374
    %v1387 = vmul.f32 %v1363, %v1374
    %v1388 = vmul.f32 %v1364, %v1374
    %v1389 = vmul.f32 %v1365, %v1374
    %v1390 = vmul.f32 %v1366, %v1374
    %v1391 = vmul.f32 %v1367, %v1374
    %s1392 = scalar_lea.vmem %s10, 1
    %v1393 = vld [vmem:[%s1392] sm:$0x1]
    %v1395 = vlaneseq
    %v1396 = vshrl.u32 %v1395, 7
    %v1397 = vsub.s32 0, %v1396
    %v1398 = vrot.slane %v1393, %v1397
    %v1400 = vadd.f32 %v1376, %v1398
    %v1401 = vadd.f32 %v1377, %v1398
    %v1402 = vadd.f32 %v1378, %v1398
    %v1403 = vadd.f32 %v1379, %v1398
    %v1404 = vadd.f32 %v1380, %v1398
    %v1405 = vadd.f32 %v1381, %v1398
    %v1406 = vadd.f32 %v1382, %v1398
    %v1407 = vadd.f32 %v1383, %v1398
    %v1408 = vadd.f32 %v1384, %v1398
    %v1409 = vadd.f32 %v1385, %v1398
    %v1410 = vadd.f32 %v1386, %v1398
    %v1411 = vadd.f32 %v1387, %v1398
    %v1412 = vadd.f32 %v1388, %v1398
    %v1413 = vadd.f32 %v1389, %v1398
    %v1414 = vadd.f32 %v1390, %v1398
    %v1415 = vadd.f32 %v1391, %v1398
    %v1416 = vmul.f32 %v1400, %v190
    %v1417 = vmul.f32 %v1401, %v191
    %v1418 = vmul.f32 %v1402, %v192
    %v1419 = vmul.f32 %v1403, %v193
    %v1420 = vmul.f32 %v1404, %v194
    %v1421 = vmul.f32 %v1405, %v195
    %v1422 = vmul.f32 %v1406, %v196
    %v1423 = vmul.f32 %v1407, %v197
    %v1424 = vmul.f32 %v1408, %v198
    %v1425 = vmul.f32 %v1409, %v199
    %v1426 = vmul.f32 %v1410, %v200
    %v1427 = vmul.f32 %v1411, %v201
    %v1428 = vmul.f32 %v1412, %v202
    %v1429 = vmul.f32 %v1413, %v203
    %v1430 = vmul.f32 %v1414, %v204
    %v1431 = vmul.f32 %v1415, %v205
    %v1432 = vpack.c.bf16 %v1417, %v1416
    %v1433 = vpack.c.bf16 %v1419, %v1418
    %v1434 = vpack.c.bf16 %v1421, %v1420
    %v1435 = vpack.c.bf16 %v1423, %v1422
    %v1436 = vpack.c.bf16 %v1425, %v1424
    %v1437 = vpack.c.bf16 %v1427, %v1426
    %v1438 = vpack.c.bf16 %v1429, %v1428
    %v1439 = vpack.c.bf16 %v1431, %v1430
    %1440 = vmatprep.subr.bf16.mxu0 0
    %1441 = vmatpush1.bf16.msra.mxu0 %v1432
    %1442 = vmatprep.subr.bf16.mxu0 0
    %1443 = vmatpush1.bf16.msra.mxu0 %v1433
    %1444 = vmatprep.subr.bf16.mxu0 0
    %1445 = vmatpush1.bf16.msra.mxu0 %v1434
    %1446 = vmatprep.subr.bf16.mxu0 0
    %1447 = vmatpush1.bf16.msra.mxu0 %v1435
    %1448 = vmatprep.subr.bf16.mxu0 0
    %1449 = vmatpush1.bf16.msra.mxu0 %v1436
    %1450 = vmatprep.subr.bf16.mxu0 0
    %1451 = vmatpush1.bf16.msra.mxu0 %v1437
    %1452 = vmatprep.subr.bf16.mxu0 0
    %1453 = vmatpush1.bf16.msra.mxu0 %v1438
    %1454 = vmatprep.subr.bf16.mxu0 0
    %1455 = vmatpush1.bf16.msra.mxu0 %v1439
    %1456 = vmatprep.subr.bf16.mxu0 0
    %1457 = vmatpush1.bf16.msra.mxu0 0
    %1458 = vmatprep.subr.bf16.mxu0 0
    %1459 = vmatpush1.bf16.msra.mxu0 0
    %1460 = vmatprep.subr.bf16.mxu0 0
    %1461 = vmatpush1.bf16.msra.mxu0 0
    %1462 = vmatprep.subr.bf16.mxu0 0
    %1463 = vmatpush1.bf16.msra.mxu0 0
    %1464 = vmatprep.subr.bf16.mxu0 0
    %1465 = vmatpush1.bf16.msra.mxu0 0
    %1466 = vmatprep.subr.bf16.mxu0 0
    %1467 = vmatpush1.bf16.msra.mxu0 0
    %1468 = vmatprep.subr.bf16.mxu0 0
    %1469 = vmatpush1.bf16.msra.mxu0 0
    %1470 = vmatprep.subr.bf16.mxu0 0
    %1471 = vmatpush1.bf16.msra.mxu0 0
    %1472 = vmatprep.mubr.bf16.mxu0 0
    %1473 = vmatmul.mubr.bf16.gmra.mrb[0].mxu0 %v246
    %v1474 = vpop.f32.mrb[0].mxu0
    %v1475 = vadd.f32 0.0, %v1474
    %v1476 = vpop.f32.mrb[0].mxu0
    %v1477 = vpop.f32.mrb[0].mxu0
    %v1478 = vadd.f32 0.0, %v1477
    %v1479 = vpop.f32.mrb[0].mxu0
    %1480 = vmatprep.mubr.bf16.mxu0 0
    %1481 = vmatmul.mubr.bf16.gmra.mrb[0].mxu0 %v247
    %v1482 = vpop.f32.mrb[0].mxu0
    %v1483 = vadd.f32 0.0, %v1482
    %v1484 = vpop.f32.mrb[0].mxu0
    %v1485 = vpop.f32.mrb[0].mxu0
    %v1486 = vadd.f32 0.0, %v1485
    %v1487 = vpop.f32.mrb[0].mxu0
    %1488 = vmatprep.mubr.bf16.mxu0 0
    %1489 = vmatmul.mubr.bf16.gmra.mrb[0].mxu0 %v248
    %v1490 = vpop.f32.mrb[0].mxu0
    %v1491 = vadd.f32 0.0, %v1490
    %v1492 = vpop.f32.mrb[0].mxu0
    %v1493 = vpop.f32.mrb[0].mxu0
    %v1494 = vadd.f32 0.0, %v1493
    %v1495 = vpop.f32.mrb[0].mxu0
    %1496 = vmatprep.mubr.bf16.mxu0 0
    %1497 = vmatmul.mubr.bf16.gmra.mrb[0].mxu0 %v249
    %v1498 = vpop.f32.mrb[0].mxu0
    %v1499 = vadd.f32 0.0, %v1498
    %v1500 = vpop.f32.mrb[0].mxu0
    %v1501 = vpop.f32.mrb[0].mxu0
    %v1502 = vadd.f32 0.0, %v1501
    %v1503 = vpop.f32.mrb[0].mxu0
    %1504 = vmatprep.mubr.bf16.mxu0 0
    %1505 = vmatmul.mubr.bf16.gmra.mrb[0].mxu0 %v250
    %v1506 = vpop.f32.mrb[0].mxu0
    %v1507 = vadd.f32 0.0, %v1506
    %v1508 = vpop.f32.mrb[0].mxu0
    %v1509 = vpop.f32.mrb[0].mxu0
    %v1510 = vadd.f32 0.0, %v1509
    %v1511 = vpop.f32.mrb[0].mxu0
    %1512 = vmatprep.mubr.bf16.mxu0 0
    %1513 = vmatmul.mubr.bf16.gmra.mrb[0].mxu0 %v251
    %v1514 = vpop.f32.mrb[0].mxu0
    %v1515 = vadd.f32 0.0, %v1514
    %v1516 = vpop.f32.mrb[0].mxu0
    %v1517 = vpop.f32.mrb[0].mxu0
    %v1518 = vadd.f32 0.0, %v1517
    %v1519 = vpop.f32.mrb[0].mxu0
    %1520 = vmatprep.mubr.bf16.mxu0 0
    %1521 = vmatmul.mubr.bf16.gmra.mrb[0].mxu0 %v252
    %v1522 = vpop.f32.mrb[0].mxu0
    %v1523 = vadd.f32 0.0, %v1522
    %v1524 = vpop.f32.mrb[0].mxu0
    %v1525 = vpop.f32.mrb[0].mxu0
    %v1526 = vadd.f32 0.0, %v1525
    %v1527 = vpop.f32.mrb[0].mxu0
    %1528 = vmatprep.mubr.bf16.mxu0 0
    %1529 = vmatmul.mubr.bf16.gmra.mrb[0].mxu0 %v253
    %v1530 = vpop.f32.mrb[0].mxu0
    %v1531 = vadd.f32 0.0, %v1530
    %v1532 = vpop.f32.mrb[0].mxu0
    %v1533 = vpop.f32.mrb[0].mxu0
    %v1534 = vadd.f32 0.0, %v1533
    %v1535 = vpop.f32.mrb[0].mxu0
    %1536 = vdwg.mxu0
    %s1537 = sld [smem:[#allocation2 + $0x2]]
    %s1538 = sadd.f32 %s1537, 1.0
    %v1539 = vstv %s1538
    %v1540 = vmul.f32 %v1539, %v1416
    %v1541 = vmul.f32 %v1539, %v1417
    %v1542 = vmul.f32 %v1539, %v1418
    %v1543 = vmul.f32 %v1539, %v1419
    %v1544 = vmul.f32 %v1539, %v1420
    %v1545 = vmul.f32 %v1539, %v1421
    %v1546 = vmul.f32 %v1539, %v1422
    %v1547 = vmul.f32 %v1539, %v1423
    %v1548 = vmul.f32 %v1539, %v1424
    %v1549 = vmul.f32 %v1539, %v1425
    %v1550 = vmul.f32 %v1539, %v1426
    %v1551 = vmul.f32 %v1539, %v1427
    %v1552 = vmul.f32 %v1539, %v1428
    %v1553 = vmul.f32 %v1539, %v1429
    %v1554 = vmul.f32 %v1539, %v1430
    %v1555 = vmul.f32 %v1539, %v1431
    %v1556 = vadd.f32 %v1540, %v1475
    %v1557 = vadd.f32 %v1541, %v1478
    %v1558 = vadd.f32 %v1542, %v1483
    %v1559 = vadd.f32 %v1543, %v1486
    %v1560 = vadd.f32 %v1544, %v1491
    %v1561 = vadd.f32 %v1545, %v1494
    %v1562 = vadd.f32 %v1546, %v1499
    %v1563 = vadd.f32 %v1547, %v1502
    %v1564 = vadd.f32 %v1548, %v1507
    %v1565 = vadd.f32 %v1549, %v1510
    %v1566 = vadd.f32 %v1550, %v1515
    %v1567 = vadd.f32 %v1551, %v1518
    %v1568 = vadd.f32 %v1552, %v1523
    %v1569 = vadd.f32 %v1553, %v1526
    %v1570 = vadd.f32 %v1554, %v1531
    %v1571 = vadd.f32 %v1555, %v1534
    %v1572 = vpack.c.bf16 %v1557, %v1556
    %v1573 = vpack.c.bf16 %v1559, %v1558
    %v1574 = vpack.c.bf16 %v1561, %v1560
    %v1575 = vpack.c.bf16 %v1563, %v1562
    %v1576 = vpack.c.bf16 %v1565, %v1564
    %v1577 = vpack.c.bf16 %v1567, %v1566
    %v1578 = vpack.c.bf16 %v1569, %v1568
    %v1579 = vpack.c.bf16 %v1571, %v1570
    %s1580 = scalar_lea.vmem [#allocation10], 128
    %v1581 = vld [vmem:[%s1580] sm:$0xf]
    %v1582 = vld [vmem:[%s1580 + $0x4] sm:$0xf]
    %v1583 = vld [vmem:[%s1580 + $0x8] sm:$0xf]
    %v1584 = vld [vmem:[%s1580 + $0xc] sm:$0xf]
    %v1585 = vld [vmem:[%s1580 + $0x10] sm:$0xf]
    %v1586 = vld [vmem:[%s1580 + $0x14] sm:$0xf]
    %v1587 = vld [vmem:[%s1580 + $0x18] sm:$0xf]
    %v1588 = vld [vmem:[%s1580 + $0x1c] sm:$0xf]
    %v1589 = vld [vmem:[%s1580 + $0x20] sm:$0xf]
    %v1590 = vld [vmem:[%s1580 + $0x24] sm:$0xf]
    %v1591 = vld [vmem:[%s1580 + $0x28] sm:$0xf]
    %v1592 = vld [vmem:[%s1580 + $0x2c] sm:$0xf]
    %v1593 = vld [vmem:[%s1580 + $0x30] sm:$0xf]
    %v1594 = vld [vmem:[%s1580 + $0x34] sm:$0xf]
    %v1595 = vld [vmem:[%s1580 + $0x38] sm:$0xf]
    %v1596 = vld [vmem:[%s1580 + $0x3c] sm:$0xf]
    %s1597 = scalar_lea.vmem %s6, 2
    %v1598 = vld [vmem:[%s1597] sm:$0x1]
    %v1600 = vlaneseq
    %v1601 = vshrl.u32 %v1600, 7
    %v1602 = vsub.s32 0, %v1601
    %v1603 = vrot.slane %v1598, %v1602
    %v1621 = vunpack.c.l.b16 %v1581
    %v1622 = vunpack.c.l.b16 %v1582
    %v1623 = vunpack.c.l.b16 %v1583
    %v1624 = vunpack.c.l.b16 %v1584
    %v1625 = vunpack.c.l.b16 %v1585
    %v1626 = vunpack.c.l.b16 %v1586
    %v1627 = vunpack.c.l.b16 %v1587
    %v1628 = vunpack.c.l.b16 %v1588
    %v1629 = vunpack.c.l.b16 %v1589
    %v1630 = vunpack.c.l.b16 %v1590
    %v1631 = vunpack.c.l.b16 %v1591
    %v1632 = vunpack.c.l.b16 %v1592
    %v1633 = vunpack.c.l.b16 %v1593
    %v1634 = vunpack.c.l.b16 %v1594
    %v1635 = vunpack.c.l.b16 %v1595
    %v1636 = vunpack.c.l.b16 %v1596
    %v1637 = vpack.c.b16 %v1622, %v1621
    %v1638 = vpack.c.b16 %v1624, %v1623
    %v1639 = vpack.c.b16 %v1626, %v1625
    %v1640 = vpack.c.b16 %v1628, %v1627
    %v1641 = vpack.c.b16 %v1630, %v1629
    %v1642 = vpack.c.b16 %v1632, %v1631
    %v1643 = vpack.c.b16 %v1634, %v1633
    %v1644 = vpack.c.b16 %v1636, %v1635
    %1653 = vmatprep.subr.bf16.mxu0 0
    %1654 = vmatpush1.bf16.msra.mxu0 %v1637
    %1655 = vmatprep.subr.bf16.mxu0 0
    %1656 = vmatpush1.bf16.msra.mxu0 %v1638
    %1657 = vmatprep.subr.bf16.mxu0 0
    %1658 = vmatpush1.bf16.msra.mxu0 %v1639
    %1659 = vmatprep.subr.bf16.mxu0 0
    %1660 = vmatpush1.bf16.msra.mxu0 %v1640
    %1661 = vmatprep.subr.bf16.mxu0 0
    %1662 = vmatpush1.bf16.msra.mxu0 %v1641
    %1663 = vmatprep.subr.bf16.mxu0 0
    %1664 = vmatpush1.bf16.msra.mxu0 %v1642
    %1665 = vmatprep.subr.bf16.mxu0 0
    %1666 = vmatpush1.bf16.msra.mxu0 %v1643
    %1667 = vmatprep.subr.bf16.mxu0 0
    %1668 = vmatpush1.bf16.msra.mxu0 %v1644
    %1669 = vmatprep.subr.bf16.mxu0 0
    %1670 = vmatpush1.bf16.msra.mxu0 0
    %1671 = vmatprep.subr.bf16.mxu0 0
    %1672 = vmatpush1.bf16.msra.mxu0 0
    %1673 = vmatprep.subr.bf16.mxu0 0
    %1674 = vmatpush1.bf16.msra.mxu0 0
    %1675 = vmatprep.subr.bf16.mxu0 0
    %1676 = vmatpush1.bf16.msra.mxu0 0
    %1677 = vmatprep.subr.bf16.mxu0 0
    %1678 = vmatpush1.bf16.msra.mxu0 0
    %1679 = vmatprep.subr.bf16.mxu0 0
    %1680 = vmatpush1.bf16.msra.mxu0 0
    %1681 = vmatprep.subr.bf16.mxu0 0
    %1682 = vmatpush1.bf16.msra.mxu0 0
    %1683 = vmatprep.subr.bf16.mxu0 0
    %1684 = vmatpush1.bf16.msra.mxu0 0
    %1685 = vmatprep.mubr.bf16.mxu0 0
    %1686 = vmatmul.mubr.bf16.gmra.mrb[0].mxu0 %v1572
    %v1687 = vpop.f32.mrb[0].mxu0
    %v1688 = vadd.f32 %v1603, %v1687
    %v1689 = vpop.f32.mrb[0].mxu0
    %v1690 = vpop.f32.mrb[0].mxu0
    %v1691 = vadd.f32 %v1603, %v1690
    %v1692 = vpop.f32.mrb[0].mxu0
    %1693 = vmatprep.mubr.bf16.mxu0 0
    %1694 = vmatmul.mubr.bf16.gmra.mrb[0].mxu0 %v1573
    %v1695 = vpop.f32.mrb[0].mxu0
    %v1696 = vadd.f32 %v1603, %v1695
    %v1697 = vpop.f32.mrb[0].mxu0
    %v1698 = vpop.f32.mrb[0].mxu0
    %v1699 = vadd.f32 %v1603, %v1698
    %v1700 = vpop.f32.mrb[0].mxu0
    %1701 = vmatprep.mubr.bf16.mxu0 0
    %1702 = vmatmul.mubr.bf16.gmra.mrb[0].mxu0 %v1574
    %v1703 = vpop.f32.mrb[0].mxu0
    %v1704 = vadd.f32 %v1603, %v1703
    %v1705 = vpop.f32.mrb[0].mxu0
    %v1706 = vpop.f32.mrb[0].mxu0
    %v1707 = vadd.f32 %v1603, %v1706
    %v1708 = vpop.f32.mrb[0].mxu0
    %1709 = vmatprep.mubr.bf16.mxu0 0
    %1710 = vmatmul.mubr.bf16.gmra.mrb[0].mxu0 %v1575
    %v1711 = vpop.f32.mrb[0].mxu0
    %v1712 = vadd.f32 %v1603, %v1711
    %v1713 = vpop.f32.mrb[0].mxu0
    %v1714 = vpop.f32.mrb[0].mxu0
    %v1715 = vadd.f32 %v1603, %v1714
    %v1716 = vpop.f32.mrb[0].mxu0
    %1717 = vmatprep.mubr.bf16.mxu0 0
    %1718 = vmatmul.mubr.bf16.gmra.mrb[0].mxu0 %v1576
    %v1719 = vpop.f32.mrb[0].mxu0
    %v1720 = vadd.f32 %v1603, %v1719
    %v1721 = vpop.f32.mrb[0].mxu0
    %v1722 = vpop.f32.mrb[0].mxu0
    %v1723 = vadd.f32 %v1603, %v1722
    %v1724 = vpop.f32.mrb[0].mxu0
    %1725 = vmatprep.mubr.bf16.mxu0 0
    %1726 = vmatmul.mubr.bf16.gmra.mrb[0].mxu0 %v1577
    %v1727 = vpop.f32.mrb[0].mxu0
    %v1728 = vadd.f32 %v1603, %v1727
    %v1729 = vpop.f32.mrb[0].mxu0
    %v1730 = vpop.f32.mrb[0].mxu0
    %v1731 = vadd.f32 %v1603, %v1730
    %v1732 = vpop.f32.mrb[0].mxu0
    %1733 = vmatprep.mubr.bf16.mxu0 0
    %1734 = vmatmul.mubr.bf16.gmra.mrb[0].mxu0 %v1578
    %v1735 = vpop.f32.mrb[0].mxu0
    %v1736 = vadd.f32 %v1603, %v1735
    %v1737 = vpop.f32.mrb[0].mxu0
    %v1738 = vpop.f32.mrb[0].mxu0
    %v1739 = vadd.f32 %v1603, %v1738
    %v1740 = vpop.f32.mrb[0].mxu0
    %1741 = vmatprep.mubr.bf16.mxu0 0
    %1742 = vmatmul.mubr.bf16.gmra.mrb[0].mxu0 %v1579
    %v1743 = vpop.f32.mrb[0].mxu0
    %v1744 = vadd.f32 %v1603, %v1743
    %v1745 = vpop.f32.mrb[0].mxu0
    %v1746 = vpop.f32.mrb[0].mxu0
    %v1747 = vadd.f32 %v1603, %v1746
    %v1748 = vpop.f32.mrb[0].mxu0
    %1749 = vdwg.mxu0
    %v1750 = vmax.f32 %v1688, 0.0
    %v1751 = vmax.f32 %v1691, 0.0
    %v1752 = vmax.f32 %v1696, 0.0
    %v1753 = vmax.f32 %v1699, 0.0
    %v1754 = vmax.f32 %v1704, 0.0
    %v1755 = vmax.f32 %v1707, 0.0
    %v1756 = vmax.f32 %v1712, 0.0
    %v1757 = vmax.f32 %v1715, 0.0
    %v1758 = vmax.f32 %v1720, 0.0
    %v1759 = vmax.f32 %v1723, 0.0
    %v1760 = vmax.f32 %v1728, 0.0
    %v1761 = vmax.f32 %v1731, 0.0
    %v1762 = vmax.f32 %v1736, 0.0
    %v1763 = vmax.f32 %v1739, 0.0
    %v1764 = vmax.f32 %v1744, 0.0
    %v1765 = vmax.f32 %v1747, 0.0
    %v1766 = vpack.c.bf16 %v1751, %v1750
    %v1767 = vpack.c.bf16 %v1753, %v1752
    %v1768 = vpack.c.bf16 %v1755, %v1754
    %v1769 = vpack.c.bf16 %v1757, %v1756
    %v1770 = vpack.c.bf16 %v1759, %v1758
    %v1771 = vpack.c.bf16 %v1761, %v1760
    %v1772 = vpack.c.bf16 %v1763, %v1762
    %v1773 = vpack.c.bf16 %v1765, %v1764
    %s1774 = scalar_lea.vmem [#allocation12], 128
    %v1775 = vld [vmem:[%s1774] sm:$0xf]
    %v1776 = vld [vmem:[%s1774 + $0x4] sm:$0xf]
    %v1777 = vld [vmem:[%s1774 + $0x8] sm:$0xf]
    %v1778 = vld [vmem:[%s1774 + $0xc] sm:$0xf]
    %v1779 = vld [vmem:[%s1774 + $0x10] sm:$0xf]
    %v1780 = vld [vmem:[%s1774 + $0x14] sm:$0xf]
    %v1781 = vld [vmem:[%s1774 + $0x18] sm:$0xf]
    %v1782 = vld [vmem:[%s1774 + $0x1c] sm:$0xf]
    %v1783 = vld [vmem:[%s1774 + $0x20] sm:$0xf]
    %v1784 = vld [vmem:[%s1774 + $0x24] sm:$0xf]
    %v1785 = vld [vmem:[%s1774 + $0x28] sm:$0xf]
    %v1786 = vld [vmem:[%s1774 + $0x2c] sm:$0xf]
    %v1787 = vld [vmem:[%s1774 + $0x30] sm:$0xf]
    %v1788 = vld [vmem:[%s1774 + $0x34] sm:$0xf]
    %v1789 = vld [vmem:[%s1774 + $0x38] sm:$0xf]
    %v1790 = vld [vmem:[%s1774 + $0x3c] sm:$0xf]
    %s1791 = scalar_lea.vmem %s8, 2
    %v1792 = vld [vmem:[%s1791] sm:$0x1]
    %v1794 = vlaneseq
    %v1795 = vshrl.u32 %v1794, 7
    %v1796 = vsub.s32 0, %v1795
    %v1797 = vrot.slane %v1792, %v1796
    %v1815 = vunpack.c.l.b16 %v1775
    %v1816 = vunpack.c.l.b16 %v1776
    %v1817 = vunpack.c.l.b16 %v1777
    %v1818 = vunpack.c.l.b16 %v1778
    %v1819 = vunpack.c.l.b16 %v1779
    %v1820 = vunpack.c.l.b16 %v1780
    %v1821 = vunpack.c.l.b16 %v1781
    %v1822 = vunpack.c.l.b16 %v1782
    %v1823 = vunpack.c.l.b16 %v1783
    %v1824 = vunpack.c.l.b16 %v1784
    %v1825 = vunpack.c.l.b16 %v1785
    %v1826 = vunpack.c.l.b16 %v1786
    %v1827 = vunpack.c.l.b16 %v1787
    %v1828 = vunpack.c.l.b16 %v1788
    %v1829 = vunpack.c.l.b16 %v1789
    %v1830 = vunpack.c.l.b16 %v1790
    %v1831 = vpack.c.b16 %v1816, %v1815
    %v1832 = vpack.c.b16 %v1818, %v1817
    %v1833 = vpack.c.b16 %v1820, %v1819
    %v1834 = vpack.c.b16 %v1822, %v1821
    %v1835 = vpack.c.b16 %v1824, %v1823
    %v1836 = vpack.c.b16 %v1826, %v1825
    %v1837 = vpack.c.b16 %v1828, %v1827
    %v1838 = vpack.c.b16 %v1830, %v1829
    %1847 = vmatprep.subr.bf16.mxu0 0
    %1848 = vmatpush1.bf16.msra.mxu0 %v1831
    %1849 = vmatprep.subr.bf16.mxu0 0
    %1850 = vmatpush1.bf16.msra.mxu0 %v1832
    %1851 = vmatprep.subr.bf16.mxu0 0
    %1852 = vmatpush1.bf16.msra.mxu0 %v1833
    %1853 = vmatprep.subr.bf16.mxu0 0
    %1854 = vmatpush1.bf16.msra.mxu0 %v1834
    %1855 = vmatprep.subr.bf16.mxu0 0
    %1856 = vmatpush1.bf16.msra.mxu0 %v1835
    %1857 = vmatprep.subr.bf16.mxu0 0
    %1858 = vmatpush1.bf16.msra.mxu0 %v1836
    %1859 = vmatprep.subr.bf16.mxu0 0
    %1860 = vmatpush1.bf16.msra.mxu0 %v1837
    %1861 = vmatprep.subr.bf16.mxu0 0
    %1862 = vmatpush1.bf16.msra.mxu0 %v1838
    %1863 = vmatprep.subr.bf16.mxu0 0
    %1864 = vmatpush1.bf16.msra.mxu0 0
    %1865 = vmatprep.subr.bf16.mxu0 0
    %1866 = vmatpush1.bf16.msra.mxu0 0
    %1867 = vmatprep.subr.bf16.mxu0 0
    %1868 = vmatpush1.bf16.msra.mxu0 0
    %1869 = vmatprep.subr.bf16.mxu0 0
    %1870 = vmatpush1.bf16.msra.mxu0 0
    %1871 = vmatprep.subr.bf16.mxu0 0
    %1872 = vmatpush1.bf16.msra.mxu0 0
    %1873 = vmatprep.subr.bf16.mxu0 0
    %1874 = vmatpush1.bf16.msra.mxu0 0
    %1875 = vmatprep.subr.bf16.mxu0 0
    %1876 = vmatpush1.bf16.msra.mxu0 0
    %1877 = vmatprep.subr.bf16.mxu0 0
    %1878 = vmatpush1.bf16.msra.mxu0 0
    %1879 = vmatprep.mubr.bf16.mxu0 0
    %1880 = vmatmul.mubr.bf16.gmra.mrb[0].mxu0 %v1766
    %v1881 = vpop.f32.mrb[0].mxu0
    %v1882 = vadd.f32 %v1797, %v1881
    %v1883 = vpop.f32.mrb[0].mxu0
    %v1884 = vpop.f32.mrb[0].mxu0
    %v1885 = vadd.f32 %v1797, %v1884
    %v1886 = vpop.f32.mrb[0].mxu0
    %1887 = vmatprep.mubr.bf16.mxu0 0
    %1888 = vmatmul.mubr.bf16.gmra.mrb[0].mxu0 %v1767
    %v1889 = vpop.f32.mrb[0].mxu0
    %v1890 = vadd.f32 %v1797, %v1889
    %v1891 = vpop.f32.mrb[0].mxu0
    %v1892 = vpop.f32.mrb[0].mxu0
    %v1893 = vadd.f32 %v1797, %v1892
    %v1894 = vpop.f32.mrb[0].mxu0
    %1895 = vmatprep.mubr.bf16.mxu0 0
    %1896 = vmatmul.mubr.bf16.gmra.mrb[0].mxu0 %v1768
    %v1897 = vpop.f32.mrb[0].mxu0
    %v1898 = vadd.f32 %v1797, %v1897
    %v1899 = vpop.f32.mrb[0].mxu0
    %v1900 = vpop.f32.mrb[0].mxu0
    %v1901 = vadd.f32 %v1797, %v1900
    %v1902 = vpop.f32.mrb[0].mxu0
    %1903 = vmatprep.mubr.bf16.mxu0 0
    %1904 = vmatmul.mubr.bf16.gmra.mrb[0].mxu0 %v1769
    %v1905 = vpop.f32.mrb[0].mxu0
    %v1906 = vadd.f32 %v1797, %v1905
    %v1907 = vpop.f32.mrb[0].mxu0
    %v1908 = vpop.f32.mrb[0].mxu0
    %v1909 = vadd.f32 %v1797, %v1908
    %v1910 = vpop.f32.mrb[0].mxu0
    %1911 = vmatprep.mubr.bf16.mxu0 0
    %1912 = vmatmul.mubr.bf16.gmra.mrb[0].mxu0 %v1770
    %v1913 = vpop.f32.mrb[0].mxu0
    %v1914 = vadd.f32 %v1797, %v1913
    %v1915 = vpop.f32.mrb[0].mxu0
    %v1916 = vpop.f32.mrb[0].mxu0
    %v1917 = vadd.f32 %v1797, %v1916
    %v1918 = vpop.f32.mrb[0].mxu0
    %1919 = vmatprep.mubr.bf16.mxu0 0
    %1920 = vmatmul.mubr.bf16.gmra.mrb[0].mxu0 %v1771
    %v1921 = vpop.f32.mrb[0].mxu0
    %v1922 = vadd.f32 %v1797, %v1921
    %v1923 = vpop.f32.mrb[0].mxu0
    %v1924 = vpop.f32.mrb[0].mxu0
    %v1925 = vadd.f32 %v1797, %v1924
    %v1926 = vpop.f32.mrb[0].mxu0
    %1927 = vmatprep.mubr.bf16.mxu0 0
    %1928 = vmatmul.mubr.bf16.gmra.mrb[0].mxu0 %v1772
    %v1929 = vpop.f32.mrb[0].mxu0
    %v1930 = vadd.f32 %v1797, %v1929
    %v1931 = vpop.f32.mrb[0].mxu0
    %v1932 = vpop.f32.mrb[0].mxu0
    %v1933 = vadd.f32 %v1797, %v1932
    %v1934 = vpop.f32.mrb[0].mxu0
    %1935 = vmatprep.mubr.bf16.mxu0 0
    %1936 = vmatmul.mubr.bf16.gmra.mrb[0].mxu0 %v1773
    %v1937 = vpop.f32.mrb[0].mxu0
    %v1938 = vadd.f32 %v1797, %v1937
    %v1939 = vpop.f32.mrb[0].mxu0
    %v1940 = vpop.f32.mrb[0].mxu0
    %v1941 = vadd.f32 %v1797, %v1940
    %v1942 = vpop.f32.mrb[0].mxu0
    %1943 = vdwg.mxu0
    %v1944 = vmax.f32 %v1882, 0.0
    %v1945 = vmax.f32 %v1885, 0.0
    %v1946 = vmax.f32 %v1890, 0.0
    %v1947 = vmax.f32 %v1893, 0.0
    %v1948 = vmax.f32 %v1898, 0.0
    %v1949 = vmax.f32 %v1901, 0.0
    %v1950 = vmax.f32 %v1906, 0.0
    %v1951 = vmax.f32 %v1909, 0.0
    %v1952 = vmax.f32 %v1914, 0.0
    %v1953 = vmax.f32 %v1917, 0.0
    %v1954 = vmax.f32 %v1922, 0.0
    %v1955 = vmax.f32 %v1925, 0.0
    %v1956 = vmax.f32 %v1930, 0.0
    %v1957 = vmax.f32 %v1933, 0.0
    %v1958 = vmax.f32 %v1938, 0.0
    %v1959 = vmax.f32 %v1941, 0.0
    %s1960 = scalar_lea.vmem %s9, 2
    %v1961 = vld [vmem:[%s1960] sm:$0x1]
    %v1963 = vlaneseq
    %v1964 = vshrl.u32 %v1963, 7
    %v1965 = vsub.s32 0, %v1964
    %v1966 = vrot.slane %v1961, %v1965
    %v1968 = vmul.f32 %v1944, %v1966
    %v1969 = vmul.f32 %v1945, %v1966
    %v1970 = vmul.f32 %v1946, %v1966
    %v1971 = vmul.f32 %v1947, %v1966
    %v1972 = vmul.f32 %v1948, %v1966
    %v1973 = vmul.f32 %v1949, %v1966
    %v1974 = vmul.f32 %v1950, %v1966
    %v1975 = vmul.f32 %v1951, %v1966
    %v1976 = vmul.f32 %v1952, %v1966
    %v1977 = vmul.f32 %v1953, %v1966
    %v1978 = vmul.f32 %v1954, %v1966
    %v1979 = vmul.f32 %v1955, %v1966
    %v1980 = vmul.f32 %v1956, %v1966
    %v1981 = vmul.f32 %v1957, %v1966
    %v1982 = vmul.f32 %v1958, %v1966
    %v1983 = vmul.f32 %v1959, %v1966
    %s1984 = scalar_lea.vmem %s10, 2
    %v1985 = vld [vmem:[%s1984] sm:$0x1]
    %v1987 = vlaneseq
    %v1988 = vshrl.u32 %v1987, 7
    %v1989 = vsub.s32 0, %v1988
    %v1990 = vrot.slane %v1985, %v1989
    %v1992 = vadd.f32 %v1968, %v1990
    %v1993 = vadd.f32 %v1969, %v1990
    %v1994 = vadd.f32 %v1970, %v1990
    %v1995 = vadd.f32 %v1971, %v1990
    %v1996 = vadd.f32 %v1972, %v1990
    %v1997 = vadd.f32 %v1973, %v1990
    %v1998 = vadd.f32 %v1974, %v1990
    %v1999 = vadd.f32 %v1975, %v1990
    %v2000 = vadd.f32 %v1976, %v1990
    %v2001 = vadd.f32 %v1977, %v1990
    %v2002 = vadd.f32 %v1978, %v1990
    %v2003 = vadd.f32 %v1979, %v1990
    %v2004 = vadd.f32 %v1980, %v1990
    %v2005 = vadd.f32 %v1981, %v1990
    %v2006 = vadd.f32 %v1982, %v1990
    %v2007 = vadd.f32 %v1983, %v1990
    %v2008 = vmul.f32 %v1992, %v190
    %v2009 = vmul.f32 %v1993, %v191
    %v2010 = vmul.f32 %v1994, %v192
    %v2011 = vmul.f32 %v1995, %v193
    %v2012 = vmul.f32 %v1996, %v194
    %v2013 = vmul.f32 %v1997, %v195
    %v2014 = vmul.f32 %v1998, %v196
    %v2015 = vmul.f32 %v1999, %v197
    %v2016 = vmul.f32 %v2000, %v198
    %v2017 = vmul.f32 %v2001, %v199
    %v2018 = vmul.f32 %v2002, %v200
    %v2019 = vmul.f32 %v2003, %v201
    %v2020 = vmul.f32 %v2004, %v202
    %v2021 = vmul.f32 %v2005, %v203
    %v2022 = vmul.f32 %v2006, %v204
    %v2023 = vmul.f32 %v2007, %v205
    %v2024 = vld [vmem:[%s4] sm:$0xf]
    %v2025 = vpack.c.bf16 %v2009, %v2008
    %v2026 = vpack.c.bf16 %v2011, %v2010
    %v2027 = vpack.c.bf16 %v2013, %v2012
    %v2028 = vpack.c.bf16 %v2015, %v2014
    %v2029 = vpack.c.bf16 %v2017, %v2016
    %v2030 = vpack.c.bf16 %v2019, %v2018
    %v2031 = vpack.c.bf16 %v2021, %v2020
    %v2032 = vpack.c.bf16 %v2023, %v2022
    %2033 = vmatprep.subr.bf16.mxu0 0
    %2034 = vmatpush1.bf16.msra.mxu0 %v2025
    %2035 = vmatprep.subr.bf16.mxu0 0
    %2036 = vmatpush1.bf16.msra.mxu0 %v2026
    %2037 = vmatprep.subr.bf16.mxu0 0
    %2038 = vmatpush1.bf16.msra.mxu0 %v2027
    %2039 = vmatprep.subr.bf16.mxu0 0
    %2040 = vmatpush1.bf16.msra.mxu0 %v2028
    %2041 = vmatprep.subr.bf16.mxu0 0
    %2042 = vmatpush1.bf16.msra.mxu0 %v2029
    %2043 = vmatprep.subr.bf16.mxu0 0
    %2044 = vmatpush1.bf16.msra.mxu0 %v2030
    %2045 = vmatprep.subr.bf16.mxu0 0
    %2046 = vmatpush1.bf16.msra.mxu0 %v2031
    %2047 = vmatprep.subr.bf16.mxu0 0
    %2048 = vmatpush1.bf16.msra.mxu0 %v2032
    %2049 = vmatprep.subr.bf16.mxu0 0
    %2050 = vmatpush1.bf16.msra.mxu0 0
    %2051 = vmatprep.subr.bf16.mxu0 0
    %2052 = vmatpush1.bf16.msra.mxu0 0
    %2053 = vmatprep.subr.bf16.mxu0 0
    %2054 = vmatpush1.bf16.msra.mxu0 0
    %2055 = vmatprep.subr.bf16.mxu0 0
    %2056 = vmatpush1.bf16.msra.mxu0 0
    %2057 = vmatprep.subr.bf16.mxu0 0
    %2058 = vmatpush1.bf16.msra.mxu0 0
    %2059 = vmatprep.subr.bf16.mxu0 0
    %2060 = vmatpush1.bf16.msra.mxu0 0
    %2061 = vmatprep.subr.bf16.mxu0 0
    %2062 = vmatpush1.bf16.msra.mxu0 0
    %2063 = vmatprep.subr.bf16.mxu0 0
    %2064 = vmatpush1.bf16.msra.mxu0 0
    %2065 = vmatprep.mubr.bf16.mxu0 0
    %2066 = vmatmul.mubr.bf16.gmra.mrb[0].mxu0 %v2024
    %v2067 = vpop.f32.mrb[0].mxu0
    %v2068 = vadd.f32 0.0, %v2067
    %v2069 = vpop.f32.mrb[0].mxu0
    %v2070 = vpop.f32.mrb[0].mxu0
    %v2071 = vpop.f32.mrb[0].mxu0
    %2072 = vdwg.mxu0
    %v2073 = vpack.c.bf16 %v2068, %v2068
    %v2074 = vld [vmem:[#allocation13] sm:$0xf]
    %v2075 = vld [vmem:[#allocation13 + $0x4] sm:$0xf]
    %v2076 = vld [vmem:[#allocation13 + $0x8] sm:$0xf]
    %v2077 = vld [vmem:[#allocation13 + $0xc] sm:$0xf]
    %v2078 = vld [vmem:[#allocation13 + $0x10] sm:$0xf]
    %v2079 = vld [vmem:[#allocation13 + $0x14] sm:$0xf]
    %v2080 = vld [vmem:[#allocation13 + $0x18] sm:$0xf]
    %v2081 = vld [vmem:[#allocation13 + $0x1c] sm:$0xf]
    %v2082 = vld [vmem:[#allocation13 + $0x20] sm:$0xf]
    %v2083 = vld [vmem:[#allocation13 + $0x24] sm:$0xf]
    %v2084 = vld [vmem:[#allocation13 + $0x28] sm:$0xf]
    %v2085 = vld [vmem:[#allocation13 + $0x2c] sm:$0xf]
    %v2086 = vld [vmem:[#allocation13 + $0x30] sm:$0xf]
    %v2087 = vld [vmem:[#allocation13 + $0x34] sm:$0xf]
    %v2088 = vld [vmem:[#allocation13 + $0x38] sm:$0xf]
    %v2089 = vld [vmem:[#allocation13 + $0x3c] sm:$0xf]
    %v2090 = vld [vmem:[%s12] sm:$0x1]
    %v2092 = vlaneseq
    %v2093 = vshrl.u32 %v2092, 7
    %v2094 = vsub.s32 0, %v2093
    %v2095 = vrot.slane %v2090, %v2094
    %v2113 = vunpack.c.l.b16 %v2074
    %v2114 = vunpack.c.l.b16 %v2075
    %v2115 = vunpack.c.l.b16 %v2076
    %v2116 = vunpack.c.l.b16 %v2077
    %v2117 = vunpack.c.l.b16 %v2078
    %v2118 = vunpack.c.l.b16 %v2079
    %v2119 = vunpack.c.l.b16 %v2080
    %v2120 = vunpack.c.l.b16 %v2081
    %v2121 = vunpack.c.l.b16 %v2082
    %v2122 = vunpack.c.l.b16 %v2083
    %v2123 = vunpack.c.l.b16 %v2084
    %v2124 = vunpack.c.l.b16 %v2085
    %v2125 = vunpack.c.l.b16 %v2086
    %v2126 = vunpack.c.l.b16 %v2087
    %v2127 = vunpack.c.l.b16 %v2088
    %v2128 = vunpack.c.l.b16 %v2089
    %v2129 = vpack.c.b16 %v2114, %v2113
    %v2130 = vpack.c.b16 %v2116, %v2115
    %v2131 = vpack.c.b16 %v2118, %v2117
    %v2132 = vpack.c.b16 %v2120, %v2119
    %v2133 = vpack.c.b16 %v2122, %v2121
    %v2134 = vpack.c.b16 %v2124, %v2123
    %v2135 = vpack.c.b16 %v2126, %v2125
    %v2136 = vpack.c.b16 %v2128, %v2127
    %2145 = vmatprep.subr.bf16.mxu0 0
    %2146 = vmatpush1.bf16.msra.mxu0 %v2129
    %2147 = vmatprep.subr.bf16.mxu0 0
    %2148 = vmatpush1.bf16.msra.mxu0 %v2130
    %2149 = vmatprep.subr.bf16.mxu0 0
    %2150 = vmatpush1.bf16.msra.mxu0 %v2131
    %2151 = vmatprep.subr.bf16.mxu0 0
    %2152 = vmatpush1.bf16.msra.mxu0 %v2132
    %2153 = vmatprep.subr.bf16.mxu0 0
    %2154 = vmatpush1.bf16.msra.mxu0 %v2133
    %2155 = vmatprep.subr.bf16.mxu0 0
    %2156 = vmatpush1.bf16.msra.mxu0 %v2134
    %2157 = vmatprep.subr.bf16.mxu0 0
    %2158 = vmatpush1.bf16.msra.mxu0 %v2135
    %2159 = vmatprep.subr.bf16.mxu0 0
    %2160 = vmatpush1.bf16.msra.mxu0 %v2136
    %2161 = vmatprep.subr.bf16.mxu0 0
    %2162 = vmatpush1.bf16.msra.mxu0 0
    %2163 = vmatprep.subr.bf16.mxu0 0
    %2164 = vmatpush1.bf16.msra.mxu0 0
    %2165 = vmatprep.subr.bf16.mxu0 0
    %2166 = vmatpush1.bf16.msra.mxu0 0
    %2167 = vmatprep.subr.bf16.mxu0 0
    %2168 = vmatpush1.bf16.msra.mxu0 0
    %2169 = vmatprep.subr.bf16.mxu0 0
    %2170 = vmatpush1.bf16.msra.mxu0 0
    %2171 = vmatprep.subr.bf16.mxu0 0
    %2172 = vmatpush1.bf16.msra.mxu0 0
    %2173 = vmatprep.subr.bf16.mxu0 0
    %2174 = vmatpush1.bf16.msra.mxu0 0
    %2175 = vmatprep.subr.bf16.mxu0 0
    %2176 = vmatpush1.bf16.msra.mxu0 0
    %2177 = vmatprep.mubr.bf16.mxu0 0
    %2178 = vmatmul.mubr.bf16.gmra.mrb[0].mxu0 %v2073
    %v2179 = vpop.f32.mrb[0].mxu0
    %v2180 = vadd.f32 %v2095, %v2179
    %v2181 = vpop.f32.mrb[0].mxu0
    %v2182 = vpop.f32.mrb[0].mxu0
    %v2183 = vpop.f32.mrb[0].mxu0
    %2184 = vdwg.mxu0
    %v2185 = vmax.f32 %v2180, 0.0
    %v2186 = vpack.c.bf16 %v2185, %v2185
    %v2187 = vld [vmem:[#allocation15] sm:$0xf]
    %v2188 = vld [vmem:[#allocation15 + $0x4] sm:$0xf]
    %v2189 = vld [vmem:[#allocation15 + $0x8] sm:$0xf]
    %v2190 = vld [vmem:[#allocation15 + $0xc] sm:$0xf]
    %v2191 = vld [vmem:[#allocation15 + $0x10] sm:$0xf]
    %v2192 = vld [vmem:[#allocation15 + $0x14] sm:$0xf]
    %v2193 = vld [vmem:[#allocation15 + $0x18] sm:$0xf]
    %v2194 = vld [vmem:[#allocation15 + $0x1c] sm:$0xf]
    %v2195 = vld [vmem:[#allocation15 + $0x20] sm:$0xf]
    %v2196 = vld [vmem:[#allocation15 + $0x24] sm:$0xf]
    %v2197 = vld [vmem:[#allocation15 + $0x28] sm:$0xf]
    %v2198 = vld [vmem:[#allocation15 + $0x2c] sm:$0xf]
    %v2199 = vld [vmem:[#allocation15 + $0x30] sm:$0xf]
    %v2200 = vld [vmem:[#allocation15 + $0x34] sm:$0xf]
    %v2201 = vld [vmem:[#allocation15 + $0x38] sm:$0xf]
    %v2202 = vld [vmem:[#allocation15 + $0x3c] sm:$0xf]
    %v2203 = vld [vmem:[%s14] sm:$0x1]
    %v2205 = vlaneseq
    %v2206 = vshrl.u32 %v2205, 7
    %v2207 = vsub.s32 0, %v2206
    %v2208 = vrot.slane %v2203, %v2207
    %v2226 = vunpack.c.l.b16 %v2187
    %v2227 = vunpack.c.l.b16 %v2188
    %v2228 = vunpack.c.l.b16 %v2189
    %v2229 = vunpack.c.l.b16 %v2190
    %v2230 = vunpack.c.l.b16 %v2191
    %v2231 = vunpack.c.l.b16 %v2192
    %v2232 = vunpack.c.l.b16 %v2193
    %v2233 = vunpack.c.l.b16 %v2194
    %v2234 = vunpack.c.l.b16 %v2195
    %v2235 = vunpack.c.l.b16 %v2196
    %v2236 = vunpack.c.l.b16 %v2197
    %v2237 = vunpack.c.l.b16 %v2198
    %v2238 = vunpack.c.l.b16 %v2199
    %v2239 = vunpack.c.l.b16 %v2200
    %v2240 = vunpack.c.l.b16 %v2201
    %v2241 = vunpack.c.l.b16 %v2202
    %v2242 = vpack.c.b16 %v2227, %v2226
    %v2243 = vpack.c.b16 %v2229, %v2228
    %v2244 = vpack.c.b16 %v2231, %v2230
    %v2245 = vpack.c.b16 %v2233, %v2232
    %v2246 = vpack.c.b16 %v2235, %v2234
    %v2247 = vpack.c.b16 %v2237, %v2236
    %v2248 = vpack.c.b16 %v2239, %v2238
    %v2249 = vpack.c.b16 %v2241, %v2240
    %2258 = vmatprep.subr.bf16.mxu0 0
    %2259 = vmatpush1.bf16.msra.mxu0 %v2242
    %2260 = vmatprep.subr.bf16.mxu0 0
    %2261 = vmatpush1.bf16.msra.mxu0 %v2243
    %2262 = vmatprep.subr.bf16.mxu0 0
    %2263 = vmatpush1.bf16.msra.mxu0 %v2244
    %2264 = vmatprep.subr.bf16.mxu0 0
    %2265 = vmatpush1.bf16.msra.mxu0 %v2245
    %2266 = vmatprep.subr.bf16.mxu0 0
    %2267 = vmatpush1.bf16.msra.mxu0 %v2246
    %2268 = vmatprep.subr.bf16.mxu0 0
    %2269 = vmatpush1.bf16.msra.mxu0 %v2247
    %2270 = vmatprep.subr.bf16.mxu0 0
    %2271 = vmatpush1.bf16.msra.mxu0 %v2248
    %2272 = vmatprep.subr.bf16.mxu0 0
    %2273 = vmatpush1.bf16.msra.mxu0 %v2249
    %2274 = vmatprep.subr.bf16.mxu0 0
    %2275 = vmatpush1.bf16.msra.mxu0 0
    %2276 = vmatprep.subr.bf16.mxu0 0
    %2277 = vmatpush1.bf16.msra.mxu0 0
    %2278 = vmatprep.subr.bf16.mxu0 0
    %2279 = vmatpush1.bf16.msra.mxu0 0
    %2280 = vmatprep.subr.bf16.mxu0 0
    %2281 = vmatpush1.bf16.msra.mxu0 0
    %2282 = vmatprep.subr.bf16.mxu0 0
    %2283 = vmatpush1.bf16.msra.mxu0 0
    %2284 = vmatprep.subr.bf16.mxu0 0
    %2285 = vmatpush1.bf16.msra.mxu0 0
    %2286 = vmatprep.subr.bf16.mxu0 0
    %2287 = vmatpush1.bf16.msra.mxu0 0
    %2288 = vmatprep.subr.bf16.mxu0 0
    %2289 = vmatpush1.bf16.msra.mxu0 0
    %2290 = vmatprep.mubr.bf16.mxu0 0
    %2291 = vmatmul.mubr.bf16.gmra.mrb[0].mxu0 %v2186
    %v2292 = vpop.f32.mrb[0].mxu0
    %v2293 = vadd.f32 %v2208, %v2292
    %v2294 = vpop.f32.mrb[0].mxu0
    %v2295 = vpop.f32.mrb[0].mxu0
    %v2296 = vpop.f32.mrb[0].mxu0
    %2297 = vdwg.mxu0
    %v2298 = vlaneseq
    %v2299 = vand.u32 %v2298, 127
    %vm2300 = vcmp.lt.s32.totalorder %v2299, 4
    %v2301 = vsel %vm2300, %v2293, -1e+30
    %2302 = vmax.xlane.f32.xlu0 %v2301
    %v2303 = vpop.xlane.xlu0 %2302
    %v2304 = vsub.f32 %v2301, %v2303
    %v2305 = vmul.f32 %v2304, 1.442695
    %v2306 = vpow.pop %v2305
    %2307 = vadd.xlane.f32.xlu0 %v2306
    %v2308 = vpop.xlane.xlu0 %2307
    %v2309 = vlog2.pop %v2308
    %v2310 = vmul.f32 %v2309, 0.6931472
    %v2311 = vsub.f32 %v2304, %v2310
    %2312 = vst [vmem:[#allocation16] sm:$0xff] %v2311
    // Predicated region
    $region94: #{tpu_custom_call.1} parent=1 // pred_check
      _
    $region95: #{tpu_custom_call.1} parent=1 // pred_check_branch
      %2314 = sbr.rel (0) target = $region97
    $region96: #{tpu_custom_call.1} parent=1 // pred_region
      %s2316 = ssub.s32 128, 128
      %2317 = vsyncadd [#allocation4], %s2316
      %s2319 = sshll.u32 [#allocation16], 4
      %s2320 = int_to_ptr.vmem [resolvable:$true] %s2319
      %2322 = dma.vmem_to_hbm [thread:$0]  %s2320, 128, %s15, [#allocation4]
    $region97: #{tpu_custom_call.1} parent=1 // pred_fallthru
      _
    // Predicated region
    $region98: #{tpu_custom_call.1} parent=1 // pred_check
      _
    $region99: #{tpu_custom_call.1} parent=1 // pred_check_branch
      %2324 = sbr.rel (0) target = $region101
    $region100: #{tpu_custom_call.1} parent=1 // pred_region
      %2325 = dma.done [#allocation4], 128
    $region101: #{tpu_custom_call.1} parent=1 // pred_fallthru
      _
    %2326 = vsyncpa [#allocation3], 1
    %2327 = vsyncpa [#allocation8], 1
    %2328 = vsyncpa [#allocation11], 1
    %2329 = vsyncpa [#allocation14], 1
    %2330 = vsyncpa [#allocation4], 1
    %2331 = vsyncpa [#allocation5], 1

</llo_original>
